<compile_context>
chip_gen: v5e
topology: v5e:2x2
jax: 0.10.0
libtpu: 0.0.40
codegen_flags: <defaults>
</compile_context>

<pallas_src>
import jax
import jax.numpy as jnp
from jax.experimental import pallas as pl
from jax.experimental.pallas import tpu as pltpu


def _make_moe_kernel(num_experts: int, out_channels: int):
    """Build the fused MoE kernel body for a fixed expert count / width."""
    E = num_experts

    def kernel(*refs):
        x_refs = refs[:E]                       # E x (TN, C_e)      bf16
        w_refs = refs[E:2 * E]                  # E x (C_e, OC_PAD)  bf16
        b_ref, wg_ref, bg_ref, out_ref = refs[2 * E:2 * E + 4]

        b = b_ref[...]                          # (E, OC_PAD)  f32
        logits = bg_ref[...]                    # (1, OC_PAD)  f32, pad = -1e30
        rs = []
        for e in range(E):
            # per-expert projection on the MXU, f32 accumulation
            r = jnp.dot(x_refs[e][...], w_refs[e][...],
                        preferred_element_type=jnp.float32) + b[e:e + 1, :]
            rs.append(r)
            # gating logits accumulated per expert; bf16 operands -> single
            # MXU pass, padded wg columns are zero so padded lanes stay -1e30
            logits = logits + jnp.dot(r.astype(jnp.bfloat16), wg_ref[e],
                                      preferred_element_type=jnp.float32)

        # f32 softmax over the 128 padded lanes == softmax over out_channels
        m = jnp.max(logits, axis=-1, keepdims=True)
        p = jnp.exp(logits - m)
        gate = p * pl.reciprocal(jnp.sum(p, axis=-1, keepdims=True),
                                 approx=True)

        # weighted sum: expert e scaled by gate channel e (buggy-as-written
        # PyTorch semantics, kept intentionally)
        o = rs[0] * gate[:, 0:1]
        for e in range(1, E):
            o = o + rs[e] * gate[:, e:e + 1]

        # store only the real channels, in bf16 (8x less HBM writeback than
        # the padded f32 store of v1)
        out_ref[...] = o[:, :out_channels].astype(out_ref.dtype)

    return kernel


def mixture_of_experts(inputs, params, out_channels, dim, tile_n=1024):
    """Pallas-backed MixtureOfExperts forward.

    inputs : list of NCHW float32 arrays, one per expert (channels may differ)
    params : dict with lists 'w' [(C_i, out_c)], 'b' [(1, out_c)],
             and 'wg' (E*out_c, out_c), 'bg' (1, out_c)
    Returns NCHW f32 array of shape (B, out_channels, H, W).
    """
    E = len(inputs)
    # gate[:, e] indexing (module's own buggy semantics) requires this:
    assert E <= out_channels, "num_experts must be <= out_channels"
    H, W = dim
    B = inputs[0].shape[0]
    OC_PAD = 128 * pl.cdiv(out_channels, 128)   # lane-dense compute width
    N = B * H * W
    n_pad = pl.cdiv(N, tile_n) * tile_n

    # --- glue: NCHW -> NHWC on the small source tensors, THEN resize ---
    # (bf16 cast fused into the resize consumer; no HBM concat — each expert
    #  is a separate Pallas input stream)
    xs = []
    for x in inputs:
        c = x.shape[1]
        x_nhwc = jnp.transpose(x, (0, 2, 3, 1))
        xr = jax.image.resize(x_nhwc, (B, H, W, c), method="bilinear",
                              antialias=False)
        xr = xr.reshape(N, c).astype(jnp.bfloat16)
        if n_pad != N:
            # zero rows flow through the softmax harmlessly and are sliced off
            xr = jnp.pad(xr, ((0, n_pad - N), (0, 0)))
        xs.append(xr)

    # --- pack lane-padded weight slabs (tiny, constant under jit) ---
    ws = []
    b_all = jnp.zeros((E, OC_PAD), jnp.float32)
    wg_all = jnp.zeros((E, OC_PAD, OC_PAD), jnp.float32)
    for e in range(E):
        c = params["w"][e].shape[0]
        w_pad = jnp.zeros((c, OC_PAD), jnp.float32)
        w_pad = w_pad.at[:, :out_channels].set(params["w"][e])
        ws.append(w_pad.astype(jnp.bfloat16))
        b_all = b_all.at[e, :out_channels].set(params["b"][e][0])
        wg_all = wg_all.at[e, :out_channels, :out_channels].set(
            params["wg"][e * out_channels:(e + 1) * out_channels, :])
    wg_all = wg_all.astype(jnp.bfloat16)
    # -1e30 bias masks the padded gate lanes; kept in f32 (bf16 would also
    # hold it, fp16 would not)
    bg_pad = jnp.full((1, OC_PAD), -1e30, jnp.float32)
    bg_pad = bg_pad.at[:, :out_channels].set(params["bg"])

    grid = (n_pad // tile_n,)
    in_specs = (
        [pl.BlockSpec((tile_n, x.shape[1]), lambda i: (i, 0)) for x in xs]
        + [pl.BlockSpec(w.shape, lambda i: (0, 0)) for w in ws]
        + [pl.BlockSpec(b_all.shape, lambda i: (0, 0)),
           pl.BlockSpec(wg_all.shape, lambda i: (0, 0, 0)),
           pl.BlockSpec(bg_pad.shape, lambda i: (0, 0))]
    )
    out_spec = pl.BlockSpec((tile_n, out_channels), lambda i: (i, 0))

    out = pl.pallas_call(
        _make_moe_kernel(E, out_channels),
        out_shape=jax.ShapeDtypeStruct((n_pad, out_channels), jnp.bfloat16),
        grid=grid,
        in_specs=in_specs,
        out_specs=out_spec,
        compiler_params=pltpu.CompilerParams(
            dimension_semantics=("parallel",),
            vmem_limit_bytes=32 * 1024 * 1024),   # covers tile_n=1024 on v5e
    )(*xs, *ws, b_all, wg_all, bg_pad)

    out = out[:N].reshape(B, H, W, out_channels).astype(jnp.float32)
    # TODO(synk): callers that can consume NHWC should skip this transpose.
    return jnp.transpose(out, (0, 3, 1, 2))  # back to NCHW


def _reference(inputs, params, out_channels, dim):
    """Pure-JAX reference with identical semantics (gating kept in f32)."""
    E = len(inputs)
    H, W = dim
    B = inputs[0].shape[0]
    r = []
    for e, x in enumerate(inputs):
        c = x.shape[1]
        xr = jax.image.resize(jnp.transpose(x, (0, 2, 3, 1)), (B, H, W, c),
                              method="bilinear", antialias=False)
        xr = xr.reshape(B * H * W, c).astype(jnp.bfloat16)
        w = params["w"][e].astype(jnp.bfloat16)
        r.append(jnp.dot(xr, w, preferred_element_type=jnp.float32)
                 + params["b"][e])
    o_s = jnp.concatenate(r, axis=-1)
    gate = jax.nn.softmax(o_s @ params["wg"] + params["bg"], axis=-1)
    o = sum(r[e] * gate[:, e:e + 1] for e in range(E))
    return jnp.transpose(o.reshape(B, H, W, out_channels), (0, 3, 1, 2))


def init_params(key, in_channels, out_channels):
    """Deterministic parameter init (nn.Linear-like uniform fan-in scaling)."""
    E = len(in_channels)
    ks = jax.random.split(key, 2 * E + 2)
    params = {"w": [], "b": []}
    for e, c in enumerate(in_channels):
        bound = 1.0 / jnp.sqrt(c)
        params["w"].append(
            jax.random.uniform(ks[2 * e], (c, out_channels), jnp.float32,
                               -bound, bound))
        params["b"].append(
            jax.random.uniform(ks[2 * e + 1], (1, out_channels), jnp.float32,
                               -bound, bound))
    cg = out_channels * E
    bound = 1.0 / jnp.sqrt(cg)
    params["wg"] = jax.random.uniform(ks[-2], (cg, out_channels), jnp.float32,
                                      -bound, bound)
    params["bg"] = jax.random.uniform(ks[-1], (1, out_channels), jnp.float32,
                                      -bound, bound)
    return params


if __name__ == "__main__":
    key = jax.random.PRNGKey(0)
    in_channels = [4, 8, 16]          # per-expert channel counts
    out_channels = 32
    dim = (16, 16)                    # common output spatial size
    B = 2

    k_in, k_p = jax.random.split(key)
    kin = jax.random.split(k_in, len(in_channels))
    # expert feature maps at different spatial resolutions (NCHW)
    spatial = [(8, 8), (16, 16), (32, 32)]
    inputs = [
        jax.random.normal(kin[e], (B, c, h, w), jnp.float32)
        for e, (c, (h, w)) in enumerate(zip(in_channels, spatial))
    ]

    params = init_params(k_p, in_channels, out_channels)

    # tile_n=256 keeps the tiny demo grid at 2 steps (exercises pipelining and
    # the megacore "parallel" axis); default tile_n=1024 for realistic sizes.
    out = mixture_of_experts(inputs, params, out_channels, dim, tile_n=256)
    out = jax.block_until_ready(out)

    ref = _reference(inputs, params, out_channels, dim)
    assert out.shape == (B, out_channels, dim[0], dim[1])
    # bf16 inputs/weights/gating/output + approx reciprocal => ~2e-2 tolerance
    assert jnp.allclose(out, ref, atol=2e-2, rtol=2e-2), \
        float(jnp.max(jnp.abs(out - ref)))

    print("KERNEL_OK")
</pallas_src>

<mosaic_0001>
module attributes {stable_mosaic.version = 11 : i64} {
  func.func @kernel(%arg0: i32, %arg1: memref<256x4xbf16, #tpu.memory_space<vmem>>, %arg2: memref<256x8xbf16, #tpu.memory_space<vmem>>, %arg3: memref<256x16xbf16, #tpu.memory_space<vmem>>, %arg4: memref<4x128xbf16, #tpu.memory_space<vmem>>, %arg5: memref<8x128xbf16, #tpu.memory_space<vmem>>, %arg6: memref<16x128xbf16, #tpu.memory_space<vmem>>, %arg7: memref<3x128xf32, #tpu.memory_space<vmem>>, %arg8: memref<3x128x128xbf16, #tpu.memory_space<vmem>>, %arg9: memref<1x128xf32, #tpu.memory_space<vmem>>, %arg10: memref<256x32xbf16, #tpu.memory_space<vmem>>) attributes {dimension_semantics = [#tpu.dimension_semantics<parallel>], iteration_bounds = array<i64: 2>, scalar_prefetch = 0 : i64, scratch_operands = 0 : i64, tpu.core_type = #tpu.core_type<tc>, window_params = [{transform_indices = @transform_0, window_bounds = array<i64: 256, 4>}, {transform_indices = @transform_1, window_bounds = array<i64: 256, 8>}, {transform_indices = @transform_2, window_bounds = array<i64: 256, 16>}, {pipeline_mode = #tpu.pipeline_mode<synchronous>, transform_indices = @transform_3, window_bounds = array<i64: 4, 128>}, {pipeline_mode = #tpu.pipeline_mode<synchronous>, transform_indices = @transform_4, window_bounds = array<i64: 8, 128>}, {pipeline_mode = #tpu.pipeline_mode<synchronous>, transform_indices = @transform_5, window_bounds = array<i64: 16, 128>}, {pipeline_mode = #tpu.pipeline_mode<synchronous>, transform_indices = @transform_6, window_bounds = array<i64: 3, 128>}, {pipeline_mode = #tpu.pipeline_mode<synchronous>, transform_indices = @transform_7, window_bounds = array<i64: 3, 128, 128>}, {pipeline_mode = #tpu.pipeline_mode<synchronous>, transform_indices = @transform_8, window_bounds = array<i64: 1, 128>}, {transform_indices = @transform_9, window_bounds = array<i64: 256, 32>}]} {
    %c0 = arith.constant 0 : index
    %c0_0 = arith.constant 0 : index
    %0 = vector.load %arg7[%c0, %c0_0] : memref<3x128xf32, #tpu.memory_space<vmem>>, vector<3x128xf32>
    %c0_1 = arith.constant 0 : index
    %c0_2 = arith.constant 0 : index
    %1 = vector.load %arg9[%c0_1, %c0_2] : memref<1x128xf32, #tpu.memory_space<vmem>>, vector<1x128xf32>
    %c0_3 = arith.constant 0 : index
    %c0_4 = arith.constant 0 : index
    %2 = vector.load %arg1[%c0_3, %c0_4] : memref<256x4xbf16, #tpu.memory_space<vmem>>, vector<256x4xbf16>
    %c0_5 = arith.constant 0 : index
    %c0_6 = arith.constant 0 : index
    %3 = vector.load %arg4[%c0_5, %c0_6] : memref<4x128xbf16, #tpu.memory_space<vmem>>, vector<4x128xbf16>
    %cst = arith.constant dense<0.000000e+00> : vector<256x128xf32>
    %4 = tpu.matmul %2, %3, %cst {dimension_numbers = #tpu.dot_dimension_numbers<[1], [0], [0], [1], [0, 0, 1, 1], [], []>} : vector<256x4xbf16>, vector<4x128xbf16>, vector<256x128xf32> -> vector<256x128xf32>
    %5 = vector.extract_strided_slice %0 {offsets = [0, 0], sizes = [1, 128], strides = [1, 1]} : vector<3x128xf32> to vector<1x128xf32>
    %6 = vector.broadcast %5 : vector<1x128xf32> to vector<256x128xf32>
    %7 = arith.addf %4, %6 : vector<256x128xf32>
    %8 = arith.truncf %7 : vector<256x128xf32> to vector<256x128xbf16>
    %c0_7 = arith.constant 0 : index
    %c0_8 = arith.constant 0 : index
    %c0_9 = arith.constant 0 : index
    %9 = vector.load %arg8[%c0_7, %c0_8, %c0_9] : memref<3x128x128xbf16, #tpu.memory_space<vmem>>, vector<1x128x128xbf16>
    %10 = vector.shape_cast %9 : vector<1x128x128xbf16> to vector<128x128xbf16>
    %cst_10 = arith.constant dense<0.000000e+00> : vector<256x128xf32>
    %11 = tpu.matmul %8, %10, %cst_10 {dimension_numbers = #tpu.dot_dimension_numbers<[1], [0], [0], [1], [0, 0, 1, 1], [], []>} : vector<256x128xbf16>, vector<128x128xbf16>, vector<256x128xf32> -> vector<256x128xf32>
    %12 = vector.broadcast %1 : vector<1x128xf32> to vector<256x128xf32>
    %13 = arith.addf %12, %11 : vector<256x128xf32>
    %c0_11 = arith.constant 0 : index
    %c0_12 = arith.constant 0 : index
    %14 = vector.load %arg2[%c0_11, %c0_12] : memref<256x8xbf16, #tpu.memory_space<vmem>>, vector<256x8xbf16>
    %c0_13 = arith.constant 0 : index
    %c0_14 = arith.constant 0 : index
    %15 = vector.load %arg5[%c0_13, %c0_14] : memref<8x128xbf16, #tpu.memory_space<vmem>>, vector<8x128xbf16>
    %cst_15 = arith.constant dense<0.000000e+00> : vector<256x128xf32>
    %16 = tpu.matmul %14, %15, %cst_15 {dimension_numbers = #tpu.dot_dimension_numbers<[1], [0], [0], [1], [0, 0, 1, 1], [], []>} : vector<256x8xbf16>, vector<8x128xbf16>, vector<256x128xf32> -> vector<256x128xf32>
    %17 = vector.extract_strided_slice %0 {offsets = [1, 0], sizes = [1, 128], strides = [1, 1]} : vector<3x128xf32> to vector<1x128xf32>
    %18 = vector.broadcast %17 : vector<1x128xf32> to vector<256x128xf32>
    %19 = arith.addf %16, %18 : vector<256x128xf32>
    %20 = arith.truncf %19 : vector<256x128xf32> to vector<256x128xbf16>
    %c1 = arith.constant 1 : index
    %c0_16 = arith.constant 0 : index
    %c0_17 = arith.constant 0 : index
    %21 = vector.load %arg8[%c1, %c0_16, %c0_17] : memref<3x128x128xbf16, #tpu.memory_space<vmem>>, vector<1x128x128xbf16>
    %22 = vector.shape_cast %21 : vector<1x128x128xbf16> to vector<128x128xbf16>
    %cst_18 = arith.constant dense<0.000000e+00> : vector<256x128xf32>
    %23 = tpu.matmul %20, %22, %cst_18 {dimension_numbers = #tpu.dot_dimension_numbers<[1], [0], [0], [1], [0, 0, 1, 1], [], []>} : vector<256x128xbf16>, vector<128x128xbf16>, vector<256x128xf32> -> vector<256x128xf32>
    %24 = arith.addf %13, %23 : vector<256x128xf32>
    %c0_19 = arith.constant 0 : index
    %c0_20 = arith.constant 0 : index
    %25 = vector.load %arg3[%c0_19, %c0_20] : memref<256x16xbf16, #tpu.memory_space<vmem>>, vector<256x16xbf16>
    %c0_21 = arith.constant 0 : index
    %c0_22 = arith.constant 0 : index
    %26 = vector.load %arg6[%c0_21, %c0_22] : memref<16x128xbf16, #tpu.memory_space<vmem>>, vector<16x128xbf16>
    %cst_23 = arith.constant dense<0.000000e+00> : vector<256x128xf32>
    %27 = tpu.matmul %25, %26, %cst_23 {dimension_numbers = #tpu.dot_dimension_numbers<[1], [0], [0], [1], [0, 0, 1, 1], [], []>} : vector<256x16xbf16>, vector<16x128xbf16>, vector<256x128xf32> -> vector<256x128xf32>
    %28 = vector.extract_strided_slice %0 {offsets = [2, 0], sizes = [1, 128], strides = [1, 1]} : vector<3x128xf32> to vector<1x128xf32>
    %29 = vector.broadcast %28 : vector<1x128xf32> to vector<256x128xf32>
    %30 = arith.addf %27, %29 : vector<256x128xf32>
    %31 = arith.truncf %30 : vector<256x128xf32> to vector<256x128xbf16>
    %c2 = arith.constant 2 : index
    %c0_24 = arith.constant 0 : index
    %c0_25 = arith.constant 0 : index
    %32 = vector.load %arg8[%c2, %c0_24, %c0_25] : memref<3x128x128xbf16, #tpu.memory_space<vmem>>, vector<1x128x128xbf16>
    %33 = vector.shape_cast %32 : vector<1x128x128xbf16> to vector<128x128xbf16>
    %cst_26 = arith.constant dense<0.000000e+00> : vector<256x128xf32>
    %34 = tpu.matmul %31, %33, %cst_26 {dimension_numbers = #tpu.dot_dimension_numbers<[1], [0], [0], [1], [0, 0, 1, 1], [], []>} : vector<256x128xbf16>, vector<128x128xbf16>, vector<256x128xf32> -> vector<256x128xf32>
    %35 = arith.addf %24, %34 : vector<256x128xf32>
    %cst_27 = arith.constant dense<0xFF800000> : vector<256xf32>
    %36 = vector.multi_reduction <maximumf>, %35, %cst_27 [1] : vector<256x128xf32> to vector<256xf32>
    %37 = vector.shape_cast %36 : vector<256xf32> to vector<256x1xf32>
    %38 = vector.broadcast %37 : vector<256x1xf32> to vector<256x128xf32>
    %39 = arith.subf %35, %38 : vector<256x128xf32>
    %40 = math.exp %39 : vector<256x128xf32>
    %cst_28 = arith.constant dense<0.000000e+00> : vector<256xf32>
    %41 = vector.multi_reduction <add>, %40, %cst_28 [1] : vector<256x128xf32> to vector<256xf32>
    %42 = vector.shape_cast %41 : vector<256xf32> to vector<256x1xf32>
    %43 = tpu.reciprocal %42 {approx = true} : vector<256x1xf32> -> vector<256x1xf32>
    %44 = vector.broadcast %43 : vector<256x1xf32> to vector<256x128xf32>
    %45 = arith.mulf %40, %44 : vector<256x128xf32>
    %46 = vector.extract_strided_slice %45 {offsets = [0, 0], sizes = [256, 1], strides = [1, 1]} : vector<256x128xf32> to vector<256x1xf32>
    %47 = vector.broadcast %46 : vector<256x1xf32> to vector<256x128xf32>
    %48 = arith.mulf %7, %47 : vector<256x128xf32>
    %49 = vector.extract_strided_slice %45 {offsets = [0, 1], sizes = [256, 1], strides = [1, 1]} : vector<256x128xf32> to vector<256x1xf32>
    %50 = vector.broadcast %49 : vector<256x1xf32> to vector<256x128xf32>
    %51 = arith.mulf %19, %50 : vector<256x128xf32>
    %52 = arith.addf %48, %51 : vector<256x128xf32>
    %53 = vector.extract_strided_slice %45 {offsets = [0, 2], sizes = [256, 1], strides = [1, 1]} : vector<256x128xf32> to vector<256x1xf32>
    %54 = vector.broadcast %53 : vector<256x1xf32> to vector<256x128xf32>
    %55 = arith.mulf %30, %54 : vector<256x128xf32>
    %56 = arith.addf %52, %55 : vector<256x128xf32>
    %57 = vector.extract_strided_slice %56 {offsets = [0, 0], sizes = [256, 32], strides = [1, 1]} : vector<256x128xf32> to vector<256x32xf32>
    %58 = arith.truncf %57 : vector<256x32xf32> to vector<256x32xbf16>
    %c0_29 = arith.constant 0 : index
    %c0_30 = arith.constant 0 : index
    %59 = vector.load %arg10[%c0_29, %c0_30] : memref<256x32xbf16, #tpu.memory_space<vmem>>, vector<256x32xbf16>
    tpu.vector_store %arg10[%c0_29, %c0_30], %58 {strides = array<i32>} : memref<256x32xbf16, #tpu.memory_space<vmem>>, vector<256x32xbf16>,
    return
  }
  func.func @transform_0(%arg0: i32) -> (i32, i32) {
    %c0_i32 = arith.constant 0 : i32
    %c0_i32_0 = arith.constant 0 : i32
    return %arg0, %c0_i32 : i32, i32
  }
  func.func @transform_1(%arg0: i32) -> (i32, i32) {
    %c0_i32 = arith.constant 0 : i32
    %c0_i32_0 = arith.constant 0 : i32
    return %arg0, %c0_i32 : i32, i32
  }
  func.func @transform_2(%arg0: i32) -> (i32, i32) {
    %c0_i32 = arith.constant 0 : i32
    %c0_i32_0 = arith.constant 0 : i32
    return %arg0, %c0_i32 : i32, i32
  }
  func.func @transform_3(%arg0: i32) -> (i32, i32) {
    %c0_i32 = arith.constant 0 : i32
    %c0_i32_0 = arith.constant 0 : i32
    %c0_i32_1 = arith.constant 0 : i32
    return %c0_i32, %c0_i32_0 : i32, i32
  }
  func.func @transform_4(%arg0: i32) -> (i32, i32) {
    %c0_i32 = arith.constant 0 : i32
    %c0_i32_0 = arith.constant 0 : i32
    %c0_i32_1 = arith.constant 0 : i32
    return %c0_i32, %c0_i32_0 : i32, i32
  }
  func.func @transform_5(%arg0: i32) -> (i32, i32) {
    %c0_i32 = arith.constant 0 : i32
    %c0_i32_0 = arith.constant 0 : i32
    %c0_i32_1 = arith.constant 0 : i32
    return %c0_i32, %c0_i32_0 : i32, i32
  }
  func.func @transform_6(%arg0: i32) -> (i32, i32) {
    %c0_i32 = arith.constant 0 : i32
    %c0_i32_0 = arith.constant 0 : i32
    %c0_i32_1 = arith.constant 0 : i32
    return %c0_i32, %c0_i32_0 : i32, i32
  }
  func.func @transform_7(%arg0: i32) -> (i32, i32, i32) {
    %c0_i32 = arith.constant 0 : i32
    %c0_i32_0 = arith.constant 0 : i32
    %c0_i32_1 = arith.constant 0 : i32
    %c0_i32_2 = arith.constant 0 : i32
    return %c0_i32, %c0_i32_0, %c0_i32_1 : i32, i32, i32
  }
  func.func @transform_8(%arg0: i32) -> (i32, i32) {
    %c0_i32 = arith.constant 0 : i32
    %c0_i32_0 = arith.constant 0 : i32
    %c0_i32_1 = arith.constant 0 : i32
    return %c0_i32, %c0_i32_0 : i32, i32
  }
  func.func @transform_9(%arg0: i32) -> (i32, i32) {
    %c0_i32 = arith.constant 0 : i32
    %c0_i32_0 = arith.constant 0 : i32
    return %arg0, %c0_i32 : i32, i32
  }
}

</mosaic_0001>

<llo_original>
// kernel: tpu_custom_call.1
$region0: #{tpu_custom_call.1}
  #allocation0 [shape = 'u32[]', space=smem, size = 0x4, offset = 0x4, fixed_abs, tag = 'smem constant byte address 0x4 - core index']
  #allocation1 [shape = 'u32[72,128]{1,0:T(1,128)}', space=vmem, size = 0x9000, scoped, tag = 'internal scratch']
  %s0 = inlined_call_operand.vmem [shape: bf16[512,4], index: 0, kind: input, shape index: {}]
  %s1 = inlined_call_operand.vmem [shape: bf16[512,8], index: 1, kind: input, shape index: {}]
  %s2 = inlined_call_operand.vmem [shape: bf16[512,16], index: 2, kind: input, shape index: {}]
  %s3 = inlined_call_operand.vmem [shape: bf16[4,128], index: 3, kind: input, shape index: {}]
  %s4 = inlined_call_operand.vmem [shape: bf16[8,128], index: 4, kind: input, shape index: {}]
  %s5 = inlined_call_operand.vmem [shape: bf16[16,128], index: 5, kind: input, shape index: {}]
  %s6 = inlined_call_operand.vmem [shape: f32[3,128], index: 6, kind: input, shape index: {}]
  %s7 = inlined_call_operand.vmem [shape: bf16[3,128,128], index: 7, kind: input, shape index: {}]
  %s8 = inlined_call_operand.vmem [shape: f32[1,128], index: 8, kind: input, shape index: {}]
  %s9 = inlined_call_operand.vmem [shape: bf16[512,32], index: 9, kind: output, shape index: {}]
  %s10 = sld [smem:[#allocation0]]
  $region69: #{tpu_custom_call.1} parent=0
    _
  %s12 = ssub.s32 1, %s10
  %s13 = scalar_select 0, %s12, %s10
  loop: start=0, step=1, limit=4
  $region2: #{tpu_custom_call.1} parent=0 // loop_pre_header
    _
  $region3: #{tpu_custom_call.1} parent=0 // loop_header
    %s15 = sphi 0, %s19
    %p16 = scmp.ge.s32.totalorder %s15, 4
    %s25 = sphi 0, %s27
    %s28 = sphi 0, %s25
    %s29 = sphi 0, %s28
    %s45 = sphi 0, %s29
    %s51 = sphi 0, %s53
    %s54 = sphi 0, %s51
    %s55 = sphi 0, %s54
    %s71 = sphi 0, %s55
    %s77 = sphi 0, %s79
    %s80 = sphi 0, %s77
    %s81 = sphi 0, %s80
    %s97 = sphi 0, %s81
    %s101 = sphi 0, %s101
    %s103 = sphi 0, %s101
    %s104 = sphi 0, %s103
    %s118 = sphi 0, %s104
    %s122 = sphi 0, %s122
    %s124 = sphi 0, %s122
    %s125 = sphi 0, %s124
    %s139 = sphi 0, %s125
    %s143 = sphi 0, %s143
    %s145 = sphi 0, %s143
    %s146 = sphi 0, %s145
    %s160 = sphi 0, %s146
    %s164 = sphi 0, %s164
    %s166 = sphi 0, %s164
    %s167 = sphi 0, %s166
    %s181 = sphi 0, %s167
    %s185 = sphi 0, %s185
    %s187 = sphi 0, %s185
    %s188 = sphi 0, %s187
    %s202 = sphi 0, %s188
    %s206 = sphi 0, %s206
    %s208 = sphi 0, %s206
    %s209 = sphi 0, %s208
    %s223 = sphi 0, %s209
    %s229 = sphi 0, %s231
    %s232 = sphi 0, %s229
    %s233 = sphi 0, %s232
    %s249 = sphi 0, %s233
  $region4: #{tpu_custom_call.1} parent=0 // loop_header_branch
    %18 = sbr.rel (%p16) target = $region8
  $region5: #{tpu_custom_call.1} parent=0 // loop_body
    %s20 = ssub.s32 %s15, 1
    %s21 = ssub.s32 %s15, 2
    %s22 = sadd.s32 %s15, 1
    %s23 = ssub.s32 %s15, %s22
    %p24 = scmp.eq.s32.totalorder %s23, 0
    %s26 = sadd.s32 %s25, 1
    %s27 = scalar_select %p24, %s25, %s26
    %p30 = pneg %p24
    %p31 = scmp.eq.s32.totalorder %s15, 1
    %p32 = por %p30, %p31
    %p33 = scmp.ne.s32.totalorder %s25, %s28
    %p34 = scmp.eq.s32.totalorder %s15, 0
    %p35 = por %p33, %p34
    %p36 = scmp.ne.s32.totalorder %s25, %s28
    %p37 = scmp.eq.s32.totalorder %s20, 1
    %p38 = por %p36, %p37
    %p39 = scmp.ne.s32.totalorder %s28, %s29
    %p40 = scmp.eq.s32.totalorder %s20, 0
    %p41 = por %p39, %p40
    %p42 = scmp.ne.s32.totalorder %s28, %s29
    %p43 = scmp.eq.s32.totalorder %s21, 1
    %p44 = por %p42, %p43
    %p46 = scmp.ne.s32.totalorder %s29, %s45
    %p47 = scmp.eq.s32.totalorder %s21, 0
    %p48 = por %p46, %p47
    %s49 = ssub.s32 %s15, %s22
    %p50 = scmp.eq.s32.totalorder %s49, 0
    %s52 = sadd.s32 %s51, 1
    %s53 = scalar_select %p50, %s51, %s52
    %p56 = pneg %p50
    %p57 = scmp.eq.s32.totalorder %s15, 1
    %p58 = por %p56, %p57
    %p59 = scmp.ne.s32.totalorder %s51, %s54
    %p60 = scmp.eq.s32.totalorder %s15, 0
    %p61 = por %p59, %p60
    %p62 = scmp.ne.s32.totalorder %s51, %s54
    %p63 = scmp.eq.s32.totalorder %s20, 1
    %p64 = por %p62, %p63
    %p65 = scmp.ne.s32.totalorder %s54, %s55
    %p66 = scmp.eq.s32.totalorder %s20, 0
    %p67 = por %p65, %p66
    %p68 = scmp.ne.s32.totalorder %s54, %s55
    %p69 = scmp.eq.s32.totalorder %s21, 1
    %p70 = por %p68, %p69
    %p72 = scmp.ne.s32.totalorder %s55, %s71
    %p73 = scmp.eq.s32.totalorder %s21, 0
    %p74 = por %p72, %p73
    %s75 = ssub.s32 %s15, %s22
    %p76 = scmp.eq.s32.totalorder %s75, 0
    %s78 = sadd.s32 %s77, 1
    %s79 = scalar_select %p76, %s77, %s78
    %p82 = pneg %p76
    %p83 = scmp.eq.s32.totalorder %s15, 1
    %p84 = por %p82, %p83
    %p85 = scmp.ne.s32.totalorder %s77, %s80
    %p86 = scmp.eq.s32.totalorder %s15, 0
    %p87 = por %p85, %p86
    %p88 = scmp.ne.s32.totalorder %s77, %s80
    %p89 = scmp.eq.s32.totalorder %s20, 1
    %p90 = por %p88, %p89
    %p91 = scmp.ne.s32.totalorder %s80, %s81
    %p92 = scmp.eq.s32.totalorder %s20, 0
    %p93 = por %p91, %p92
    %p94 = scmp.ne.s32.totalorder %s80, %s81
    %p95 = scmp.eq.s32.totalorder %s21, 1
    %p96 = por %p94, %p95
    %p98 = scmp.ne.s32.totalorder %s81, %s97
    %p99 = scmp.eq.s32.totalorder %s21, 0
    %p100 = por %p98, %p99
    %s102 = sadd.s32 %s101, 1
    %p105 = scmp.eq.s32.totalorder %s15, 1
    %p106 = scmp.ne.s32.totalorder %s101, %s103
    %p107 = scmp.eq.s32.totalorder %s15, 0
    %p108 = por %p106, %p107
    %p109 = scmp.ne.s32.totalorder %s101, %s103
    %p110 = scmp.eq.s32.totalorder %s20, 1
    %p111 = por %p109, %p110
    %p112 = scmp.ne.s32.totalorder %s103, %s104
    %p113 = scmp.eq.s32.totalorder %s20, 0
    %p114 = por %p112, %p113
    %p115 = scmp.ne.s32.totalorder %s103, %s104
    %p116 = scmp.eq.s32.totalorder %s21, 1
    %p117 = por %p115, %p116
    %p119 = scmp.ne.s32.totalorder %s104, %s118
    %p120 = scmp.eq.s32.totalorder %s21, 0
    %p121 = por %p119, %p120
    %s123 = sadd.s32 %s122, 1
    %p126 = scmp.eq.s32.totalorder %s15, 1
    %p127 = scmp.ne.s32.totalorder %s122, %s124
    %p128 = scmp.eq.s32.totalorder %s15, 0
    %p129 = por %p127, %p128
    %p130 = scmp.ne.s32.totalorder %s122, %s124
    %p131 = scmp.eq.s32.totalorder %s20, 1
    %p132 = por %p130, %p131
    %p133 = scmp.ne.s32.totalorder %s124, %s125
    %p134 = scmp.eq.s32.totalorder %s20, 0
    %p135 = por %p133, %p134
    %p136 = scmp.ne.s32.totalorder %s124, %s125
    %p137 = scmp.eq.s32.totalorder %s21, 1
    %p138 = por %p136, %p137
    %p140 = scmp.ne.s32.totalorder %s125, %s139
    %p141 = scmp.eq.s32.totalorder %s21, 0
    %p142 = por %p140, %p141
    %s144 = sadd.s32 %s143, 1
    %p147 = scmp.eq.s32.totalorder %s15, 1
    %p148 = scmp.ne.s32.totalorder %s143, %s145
    %p149 = scmp.eq.s32.totalorder %s15, 0
    %p150 = por %p148, %p149
    %p151 = scmp.ne.s32.totalorder %s143, %s145
    %p152 = scmp.eq.s32.totalorder %s20, 1
    %p153 = por %p151, %p152
    %p154 = scmp.ne.s32.totalorder %s145, %s146
    %p155 = scmp.eq.s32.totalorder %s20, 0
    %p156 = por %p154, %p155
    %p157 = scmp.ne.s32.totalorder %s145, %s146
    %p158 = scmp.eq.s32.totalorder %s21, 1
    %p159 = por %p157, %p158
    %p161 = scmp.ne.s32.totalorder %s146, %s160
    %p162 = scmp.eq.s32.totalorder %s21, 0
    %p163 = por %p161, %p162
    %s165 = sadd.s32 %s164, 1
    %p168 = scmp.eq.s32.totalorder %s15, 1
    %p169 = scmp.ne.s32.totalorder %s164, %s166
    %p170 = scmp.eq.s32.totalorder %s15, 0
    %p171 = por %p169, %p170
    %p172 = scmp.ne.s32.totalorder %s164, %s166
    %p173 = scmp.eq.s32.totalorder %s20, 1
    %p174 = por %p172, %p173
    %p175 = scmp.ne.s32.totalorder %s166, %s167
    %p176 = scmp.eq.s32.totalorder %s20, 0
    %p177 = por %p175, %p176
    %p178 = scmp.ne.s32.totalorder %s166, %s167
    %p179 = scmp.eq.s32.totalorder %s21, 1
    %p180 = por %p178, %p179
    %p182 = scmp.ne.s32.totalorder %s167, %s181
    %p183 = scmp.eq.s32.totalorder %s21, 0
    %p184 = por %p182, %p183
    %s186 = sadd.s32 %s185, 1
    %p189 = scmp.eq.s32.totalorder %s15, 1
    %p190 = scmp.ne.s32.totalorder %s185, %s187
    %p191 = scmp.eq.s32.totalorder %s15, 0
    %p192 = por %p190, %p191
    %p193 = scmp.ne.s32.totalorder %s185, %s187
    %p194 = scmp.eq.s32.totalorder %s20, 1
    %p195 = por %p193, %p194
    %p196 = scmp.ne.s32.totalorder %s187, %s188
    %p197 = scmp.eq.s32.totalorder %s20, 0
    %p198 = por %p196, %p197
    %p199 = scmp.ne.s32.totalorder %s187, %s188
    %p200 = scmp.eq.s32.totalorder %s21, 1
    %p201 = por %p199, %p200
    %p203 = scmp.ne.s32.totalorder %s188, %s202
    %p204 = scmp.eq.s32.totalorder %s21, 0
    %p205 = por %p203, %p204
    %s207 = sadd.s32 %s206, 1
    %p210 = scmp.eq.s32.totalorder %s15, 1
    %p211 = scmp.ne.s32.totalorder %s206, %s208
    %p212 = scmp.eq.s32.totalorder %s15, 0
    %p213 = por %p211, %p212
    %p214 = scmp.ne.s32.totalorder %s206, %s208
    %p215 = scmp.eq.s32.totalorder %s20, 1
    %p216 = por %p214, %p215
    %p217 = scmp.ne.s32.totalorder %s208, %s209
    %p218 = scmp.eq.s32.totalorder %s20, 0
    %p219 = por %p217, %p218
    %p220 = scmp.ne.s32.totalorder %s208, %s209
    %p221 = scmp.eq.s32.totalorder %s21, 1
    %p222 = por %p220, %p221
    %p224 = scmp.ne.s32.totalorder %s209, %s223
    %p225 = scmp.eq.s32.totalorder %s21, 0
    %p226 = por %p224, %p225
    %s227 = ssub.s32 %s15, %s22
    %p228 = scmp.eq.s32.totalorder %s227, 0
    %s230 = sadd.s32 %s229, 1
    %s231 = scalar_select %p228, %s229, %s230
    %p234 = pneg %p228
    %p235 = scmp.eq.s32.totalorder %s15, 1
    %p236 = por %p234, %p235
    %p237 = scmp.ne.s32.totalorder %s229, %s232
    %p238 = scmp.eq.s32.totalorder %s15, 0
    %p239 = por %p237, %p238
    %p240 = scmp.ne.s32.totalorder %s229, %s232
    %p241 = scmp.eq.s32.totalorder %s20, 1
    %p242 = por %p240, %p241
    %p243 = scmp.ne.s32.totalorder %s232, %s233
    %p244 = scmp.eq.s32.totalorder %s20, 0
    %p245 = por %p243, %p244
    %p246 = scmp.ne.s32.totalorder %s232, %s233
    %p247 = scmp.eq.s32.totalorder %s21, 1
    %p248 = por %p246, %p247
    %p250 = scmp.ne.s32.totalorder %s233, %s249
    %p251 = scmp.eq.s32.totalorder %s21, 0
    %p252 = por %p250, %p251
    %p253 = scmp.le.s32.totalorder 1, %s15
    %p254 = scmp.lt.s32.totalorder %s15, 3
    %p255 = pnand %p253, %p254
    %p256 = pneg %p255
    // Predicated region
    $region9: #{tpu_custom_call.1} parent=5 // pred_check
      _
    $region10: #{tpu_custom_call.1} parent=5 // pred_check_branch
      %258 = sbr.rel (%p255) target = $region12
    $region11: #{tpu_custom_call.1} parent=5 // pred_region
      %s259 = ssub.s32 %s15, 1
      // Predicated region
      $region13: #{tpu_custom_call.1} parent=11 // pred_check
        %p260 = pneg %p114
      $region14: #{tpu_custom_call.1} parent=11 // pred_check_branch
        %262 = sbr.rel (%p260) target = $region16
      $region15: #{tpu_custom_call.1} parent=11 // pred_region
        _
      $region16: #{tpu_custom_call.1} parent=11 // pred_fallthru
        _
      // Predicated region
      $region17: #{tpu_custom_call.1} parent=11 // pred_check
        %p263 = pneg %p135
      $region18: #{tpu_custom_call.1} parent=11 // pred_check_branch
        %265 = sbr.rel (%p263) target = $region20
      $region19: #{tpu_custom_call.1} parent=11 // pred_region
        _
      $region20: #{tpu_custom_call.1} parent=11 // pred_fallthru
        _
      // Predicated region
      $region21: #{tpu_custom_call.1} parent=11 // pred_check
        %p266 = pneg %p156
      $region22: #{tpu_custom_call.1} parent=11 // pred_check_branch
        %268 = sbr.rel (%p266) target = $region24
      $region23: #{tpu_custom_call.1} parent=11 // pred_region
        _
      $region24: #{tpu_custom_call.1} parent=11 // pred_fallthru
        _
      // Predicated region
      $region25: #{tpu_custom_call.1} parent=11 // pred_check
        %p269 = pneg %p177
      $region26: #{tpu_custom_call.1} parent=11 // pred_check_branch
        %271 = sbr.rel (%p269) target = $region28
      $region27: #{tpu_custom_call.1} parent=11 // pred_region
        _
      $region28: #{tpu_custom_call.1} parent=11 // pred_fallthru
        _
      // Predicated region
      $region29: #{tpu_custom_call.1} parent=11 // pred_check
        %p272 = pneg %p198
      $region30: #{tpu_custom_call.1} parent=11 // pred_check_branch
        %274 = sbr.rel (%p272) target = $region32
      $region31: #{tpu_custom_call.1} parent=11 // pred_region
        _
      $region32: #{tpu_custom_call.1} parent=11 // pred_fallthru
        _
      // Predicated region
      $region33: #{tpu_custom_call.1} parent=11 // pred_check
        %p275 = pneg %p219
      $region34: #{tpu_custom_call.1} parent=11 // pred_check_branch
        %277 = sbr.rel (%p275) target = $region36
      $region35: #{tpu_custom_call.1} parent=11 // pred_region
        _
      $region36: #{tpu_custom_call.1} parent=11 // pred_fallthru
        _
    $region12: #{tpu_custom_call.1} parent=5 // pred_fallthru
      _
    %p278 = scmp.lt.s32.totalorder %s15, 2
    // Predicated region
    $region37: #{tpu_custom_call.1} parent=5 // pred_check
      %p279 = pneg %p278
    $region38: #{tpu_custom_call.1} parent=5 // pred_check_branch
      %281 = sbr.rel (%p279) target = $region40
    $region39: #{tpu_custom_call.1} parent=5 // pred_region
      // Predicated region
      $region41: #{tpu_custom_call.1} parent=39 // pred_check
        %p282 = pneg %p35
      $region42: #{tpu_custom_call.1} parent=39 // pred_check_branch
        %284 = sbr.rel (%p282) target = $region44
      $region43: #{tpu_custom_call.1} parent=39 // pred_region
        %s285 = smul.u32 32, %s15
        %p286 = scmp.lt.s32.totalorder %s285, 63
        %s287 = scalar_select %p286, %s285, 63
        %s288 = smul.addr %s287, 4
        %s289 = scalar_lea.vmem %s0, %s288
        %s290 = smul.u32 32, %s15
      $region44: #{tpu_custom_call.1} parent=39 // pred_fallthru
        _
      // Predicated region
      $region45: #{tpu_custom_call.1} parent=39 // pred_check
        %p291 = pneg %p61
      $region46: #{tpu_custom_call.1} parent=39 // pred_check_branch
        %293 = sbr.rel (%p291) target = $region48
      $region47: #{tpu_custom_call.1} parent=39 // pred_region
        %s294 = smul.u32 32, %s15
        %p295 = scmp.lt.s32.totalorder %s294, 63
        %s296 = scalar_select %p295, %s294, 63
        %s297 = smul.addr %s296, 4
        %s298 = scalar_lea.vmem %s1, %s297
        %s299 = smul.u32 32, %s15
      $region48: #{tpu_custom_call.1} parent=39 // pred_fallthru
        _
      // Predicated region
      $region49: #{tpu_custom_call.1} parent=39 // pred_check
        %p300 = pneg %p87
      $region50: #{tpu_custom_call.1} parent=39 // pred_check_branch
        %302 = sbr.rel (%p300) target = $region52
      $region51: #{tpu_custom_call.1} parent=39 // pred_region
        %s303 = smul.u32 32, %s15
        %p304 = scmp.lt.s32.totalorder %s303, 63
        %s305 = scalar_select %p304, %s303, 63
        %s306 = smul.addr %s305, 4
        %s307 = scalar_lea.vmem %s2, %s306
        %s308 = smul.u32 32, %s15
      $region52: #{tpu_custom_call.1} parent=39 // pred_fallthru
        _
    $region40: #{tpu_custom_call.1} parent=5 // pred_fallthru
      _
    %p309 = scmp.le.s32.totalorder 1, %s15
    %p310 = scmp.lt.s32.totalorder %s15, 3
    %p311 = pnand %p309, %p310
    %p312 = pneg %p311
    // Predicated region
    $region53: #{tpu_custom_call.1} parent=5 // pred_check
      _
    $region54: #{tpu_custom_call.1} parent=5 // pred_check_branch
      %314 = sbr.rel (%p311) target = $region56
    $region55: #{tpu_custom_call.1} parent=5 // pred_region
      %s315 = ssub.s32 %s15, 1
      %s316 = smul.u32 32, %s20
      %p317 = scmp.lt.s32.totalorder %s316, 63
      %s318 = scalar_select %p317, %s316, 63
      %s319 = smul.addr %s318, 4
      %s320 = scalar_lea.vmem %s0, %s319
      %p321 = pneg %p41
      %p322 = pneg %p38
      %s323 = smul.u32 32, %s20
      %p324 = scmp.lt.s32.totalorder %s323, 63
      %s325 = scalar_select %p324, %s323, 63
      %s326 = smul.addr %s325, 4
      %s327 = scalar_lea.vmem %s1, %s326
      %p328 = pneg %p67
      %p329 = pneg %p64
      %s330 = smul.u32 32, %s20
      %p331 = scmp.lt.s32.totalorder %s330, 63
      %s332 = scalar_select %p331, %s330, 63
      %s333 = smul.addr %s332, 4
      %s334 = scalar_lea.vmem %s2, %s333
      %p335 = pneg %p93
      %p336 = pneg %p90
      %p337 = pneg %p114
      %p338 = pneg %p111
      %p339 = pneg %p135
      %p340 = pneg %p132
      %p341 = pneg %p156
      %p342 = pneg %p153
      %p343 = pneg %p177
      %p344 = pneg %p174
      %p345 = pneg %p198
      %p346 = pneg %p195
      %p347 = pneg %p219
      %p348 = pneg %p216
      %p349 = pneg %p245
      %p350 = pneg %p242
      %s351 = smul.u32 32, %s20
      %p352 = scmp.lt.s32.totalorder %s351, 63
      %s353 = scalar_select %p352, %s351, 63
      %s354 = smul.addr %s353, 4
      %s355 = scalar_lea.vmem %s9, %s354
      %s356 = smul.u32 32, %s20
      %p357 = scmp.lt.s32.totalorder %s356, 63
      %s358 = scalar_select %p357, %s356, 63
      %s359 = smul.addr %s358, 4
      %s360 = scalar_lea.vmem %s0, %s359
      %s361 = smul.u32 32, %s20
      %s362 = smul.u32 32, %s20
      %p363 = scmp.lt.s32.totalorder %s362, 63
      %s364 = scalar_select %p363, %s362, 63
      %s365 = smul.addr %s364, 4
      %s366 = scalar_lea.vmem %s1, %s365
      %s367 = smul.u32 32, %s20
      %s368 = smul.u32 32, %s20
      %p369 = scmp.lt.s32.totalorder %s368, 63
      %s370 = scalar_select %p369, %s368, 63
      %s371 = smul.addr %s370, 4
      %s372 = scalar_lea.vmem %s2, %s371
      %s373 = smul.u32 32, %s20
      %s374 = smul.u32 32, %s20
      %p375 = scmp.lt.s32.totalorder %s374, 63
      %s376 = scalar_select %p375, %s374, 63
      %s377 = smul.addr %s376, 4
      %s378 = scalar_lea.vmem %s9, %s377
      %s379 = smul.u32 32, %s20
      %v381 = vld [vmem:[%s6] sm:$0x7]
      %v382 = vld [vmem:[%s8] sm:$0x1]
      %v383 = vld [vmem:[%s360] sm:$0xf]
      %v384 = vld [vmem:[%s360 + $0x4] sm:$0xf]
      %v385 = vld [vmem:[%s360 + $0x8] sm:$0xf]
      %v386 = vld [vmem:[%s360 + $0xc] sm:$0xf]
      %v387 = vld [vmem:[%s360 + $0x10] sm:$0xf]
      %v388 = vld [vmem:[%s360 + $0x14] sm:$0xf]
      %v389 = vld [vmem:[%s360 + $0x18] sm:$0xf]
      %v390 = vld [vmem:[%s360 + $0x1c] sm:$0xf]
      %v391 = vld [vmem:[%s360 + $0x20] sm:$0xf]
      %v392 = vld [vmem:[%s360 + $0x24] sm:$0xf]
      %v393 = vld [vmem:[%s360 + $0x28] sm:$0xf]
      %v394 = vld [vmem:[%s360 + $0x2c] sm:$0xf]
      %v395 = vld [vmem:[%s360 + $0x30] sm:$0xf]
      %v396 = vld [vmem:[%s360 + $0x34] sm:$0xf]
      %v397 = vld [vmem:[%s360 + $0x38] sm:$0xf]
      %v398 = vld [vmem:[%s360 + $0x3c] sm:$0xf]
      %v399 = vld [vmem:[%s360 + $0x40] sm:$0xf]
      %v400 = vld [vmem:[%s360 + $0x44] sm:$0xf]
      %v401 = vld [vmem:[%s360 + $0x48] sm:$0xf]
      %v402 = vld [vmem:[%s360 + $0x4c] sm:$0xf]
      %v403 = vld [vmem:[%s360 + $0x50] sm:$0xf]
      %v404 = vld [vmem:[%s360 + $0x54] sm:$0xf]
      %v405 = vld [vmem:[%s360 + $0x58] sm:$0xf]
      %v406 = vld [vmem:[%s360 + $0x5c] sm:$0xf]
      %v407 = vld [vmem:[%s360 + $0x60] sm:$0xf]
      %v408 = vld [vmem:[%s360 + $0x64] sm:$0xf]
      %v409 = vld [vmem:[%s360 + $0x68] sm:$0xf]
      %v410 = vld [vmem:[%s360 + $0x6c] sm:$0xf]
      %v411 = vld [vmem:[%s360 + $0x70] sm:$0xf]
      %v412 = vld [vmem:[%s360 + $0x74] sm:$0xf]
      %v413 = vld [vmem:[%s360 + $0x78] sm:$0xf]
      %v414 = vld [vmem:[%s360 + $0x7c] sm:$0xf]
      %v415 = vld [vmem:[%s3] sm:$0x3]
      %v416 = vperm.slane %v381, 0
      %v449 = vunpack.c.l.b16 %v383
      %v450 = vunpack.c.l.b16 %v384
      %v451 = vunpack.c.l.b16 %v385
      %v452 = vunpack.c.l.b16 %v386
      %v453 = vunpack.c.l.b16 %v387
      %v454 = vunpack.c.l.b16 %v388
      %v455 = vunpack.c.l.b16 %v389
      %v456 = vunpack.c.l.b16 %v390
      %v457 = vunpack.c.l.b16 %v391
      %v458 = vunpack.c.l.b16 %v392
      %v459 = vunpack.c.l.b16 %v393
      %v460 = vunpack.c.l.b16 %v394
      %v461 = vunpack.c.l.b16 %v395
      %v462 = vunpack.c.l.b16 %v396
      %v463 = vunpack.c.l.b16 %v397
      %v464 = vunpack.c.l.b16 %v398
      %v465 = vunpack.c.l.b16 %v399
      %v466 = vunpack.c.l.b16 %v400
      %v467 = vunpack.c.l.b16 %v401
      %v468 = vunpack.c.l.b16 %v402
      %v469 = vunpack.c.l.b16 %v403
      %v470 = vunpack.c.l.b16 %v404
      %v471 = vunpack.c.l.b16 %v405
      %v472 = vunpack.c.l.b16 %v406
      %v473 = vunpack.c.l.b16 %v407
      %v474 = vunpack.c.l.b16 %v408
      %v475 = vunpack.c.l.b16 %v409
      %v476 = vunpack.c.l.b16 %v410
      %v477 = vunpack.c.l.b16 %v411
      %v478 = vunpack.c.l.b16 %v412
      %v479 = vunpack.c.l.b16 %v413
      %v480 = vunpack.c.l.b16 %v414
      %v481 = vpack.c.b16 %v450, %v449
      %v482 = vpack.c.b16 %v452, %v451
      %v483 = vpack.c.b16 %v454, %v453
      %v484 = vpack.c.b16 %v456, %v455
      %v485 = vpack.c.b16 %v458, %v457
      %v486 = vpack.c.b16 %v460, %v459
      %v487 = vpack.c.b16 %v462, %v461
      %v488 = vpack.c.b16 %v464, %v463
      %v489 = vpack.c.b16 %v466, %v465
      %v490 = vpack.c.b16 %v468, %v467
      %v491 = vpack.c.b16 %v470, %v469
      %v492 = vpack.c.b16 %v472, %v471
      %v493 = vpack.c.b16 %v474, %v473
      %v494 = vpack.c.b16 %v476, %v475
      %v495 = vpack.c.b16 %v478, %v477
      %v496 = vpack.c.b16 %v480, %v479
      %vm497 = vcmask 31744
      %v499 = vsel %vm497, %v481, 0
      %v502 = vsel %vm497, %v482, 0
      %v505 = vsel %vm497, %v483, 0
      %v508 = vsel %vm497, %v484, 0
      %v511 = vsel %vm497, %v485, 0
      %v514 = vsel %vm497, %v486, 0
      %v517 = vsel %vm497, %v487, 0
      %v520 = vsel %vm497, %v488, 0
      %v523 = vsel %vm497, %v489, 0
      %v526 = vsel %vm497, %v490, 0
      %v529 = vsel %vm497, %v491, 0
      %v532 = vsel %vm497, %v492, 0
      %v535 = vsel %vm497, %v493, 0
      %v538 = vsel %vm497, %v494, 0
      %v541 = vsel %vm497, %v495, 0
      %v544 = vsel %vm497, %v496, 0
      %vm546 = vcmask 1041408
      %v548 = vsel %vm546, %v415, 0
      %550 = vmatpush.bf16.msra.mxu0 0
      %551 = vmatpush.bf16.msra.mxu0 0
      %552 = vmatpush.bf16.msra.mxu0 0
      %553 = vmatpush.bf16.msra.mxu0 0
      %554 = vmatpush.bf16.msra.mxu0 0
      %555 = vmatpush.bf16.msra.mxu0 0
      %556 = vmatpush.bf16.msra.mxu0 0
      %557 = vmatpush.bf16.msra.mxu0 %v548
      %558 = vmatmul.bf16.gmra.mxu0 %v499
      %v559 = vpop.f32.mrf.mxu0
      %v560 = vadd.f32 %v416, %v559
      %v561 = vpop.f32.mrf.mxu0
      %v562 = vadd.f32 %v416, %v561
      %563 = vmatmul.bf16.gmra.mxu0 %v502
      %v564 = vpop.f32.mrf.mxu0
      %v565 = vadd.f32 %v416, %v564
      %v566 = vpop.f32.mrf.mxu0
      %v567 = vadd.f32 %v416, %v566
      %568 = vmatmul.bf16.gmra.mxu0 %v505
      %v569 = vpop.f32.mrf.mxu0
      %v570 = vadd.f32 %v416, %v569
      %v571 = vpop.f32.mrf.mxu0
      %v572 = vadd.f32 %v416, %v571
      %573 = vmatmul.bf16.gmra.mxu0 %v508
      %v574 = vpop.f32.mrf.mxu0
      %v575 = vadd.f32 %v416, %v574
      %v576 = vpop.f32.mrf.mxu0
      %v577 = vadd.f32 %v416, %v576
      %578 = vmatmul.bf16.gmra.mxu0 %v511
      %v579 = vpop.f32.mrf.mxu0
      %v580 = vadd.f32 %v416, %v579
      %v581 = vpop.f32.mrf.mxu0
      %v582 = vadd.f32 %v416, %v581
      %583 = vmatmul.bf16.gmra.mxu0 %v514
      %v584 = vpop.f32.mrf.mxu0
      %v585 = vadd.f32 %v416, %v584
      %v586 = vpop.f32.mrf.mxu0
      %v587 = vadd.f32 %v416, %v586
      %588 = vmatmul.bf16.gmra.mxu0 %v517
      %v589 = vpop.f32.mrf.mxu0
      %v590 = vadd.f32 %v416, %v589
      %v591 = vpop.f32.mrf.mxu0
      %v592 = vadd.f32 %v416, %v591
      %593 = vmatmul.bf16.gmra.mxu0 %v520
      %v594 = vpop.f32.mrf.mxu0
      %v595 = vadd.f32 %v416, %v594
      %v596 = vpop.f32.mrf.mxu0
      %v597 = vadd.f32 %v416, %v596
      %598 = vmatmul.bf16.gmra.mxu0 %v523
      %v599 = vpop.f32.mrf.mxu0
      %v600 = vadd.f32 %v416, %v599
      %v601 = vpop.f32.mrf.mxu0
      %v602 = vadd.f32 %v416, %v601
      %603 = vmatmul.bf16.gmra.mxu0 %v526
      %v604 = vpop.f32.mrf.mxu0
      %v605 = vadd.f32 %v416, %v604
      %v606 = vpop.f32.mrf.mxu0
      %v607 = vadd.f32 %v416, %v606
      %608 = vmatmul.bf16.gmra.mxu0 %v529
      %v609 = vpop.f32.mrf.mxu0
      %v610 = vadd.f32 %v416, %v609
      %v611 = vpop.f32.mrf.mxu0
      %v612 = vadd.f32 %v416, %v611
      %613 = vmatmul.bf16.gmra.mxu0 %v532
      %v614 = vpop.f32.mrf.mxu0
      %v615 = vadd.f32 %v416, %v614
      %v616 = vpop.f32.mrf.mxu0
      %v617 = vadd.f32 %v416, %v616
      %618 = vmatmul.bf16.gmra.mxu0 %v535
      %v619 = vpop.f32.mrf.mxu0
      %v620 = vadd.f32 %v416, %v619
      %v621 = vpop.f32.mrf.mxu0
      %v622 = vadd.f32 %v416, %v621
      %623 = vmatmul.bf16.gmra.mxu0 %v538
      %v624 = vpop.f32.mrf.mxu0
      %v625 = vadd.f32 %v416, %v624
      %v626 = vpop.f32.mrf.mxu0
      %v627 = vadd.f32 %v416, %v626
      %628 = vmatmul.bf16.gmra.mxu0 %v541
      %v629 = vpop.f32.mrf.mxu0
      %v630 = vadd.f32 %v416, %v629
      %v631 = vpop.f32.mrf.mxu0
      %v632 = vadd.f32 %v416, %v631
      %633 = vmatmul.bf16.gmra.mxu0 %v544
      %v634 = vpop.f32.mrf.mxu0
      %v635 = vadd.f32 %v416, %v634
      %v636 = vpop.f32.mrf.mxu0
      %v637 = vadd.f32 %v416, %v636
      %638 = vdwg.mxu0
      %v639 = vpack.c.bf16 %v562, %v560
      %v640 = vpack.c.bf16 %v567, %v565
      %v641 = vpack.c.bf16 %v572, %v570
      %v642 = vpack.c.bf16 %v577, %v575
      %v643 = vpack.c.bf16 %v582, %v580
      %v644 = vpack.c.bf16 %v587, %v585
      %v645 = vpack.c.bf16 %v592, %v590
      %v646 = vpack.c.bf16 %v597, %v595
      %v647 = vpack.c.bf16 %v602, %v600
      %v648 = vpack.c.bf16 %v607, %v605
      %v649 = vpack.c.bf16 %v612, %v610
      %v650 = vpack.c.bf16 %v617, %v615
      %v651 = vpack.c.bf16 %v622, %v620
      %v652 = vpack.c.bf16 %v627, %v625
      %v653 = vpack.c.bf16 %v632, %v630
      %v654 = vpack.c.bf16 %v637, %v635
      %v655 = vld [vmem:[%s7] sm:$0xf]
      %v656 = vld [vmem:[%s7 + $0x4] sm:$0xf]
      %v657 = vld [vmem:[%s7 + $0x8] sm:$0xf]
      %v658 = vld [vmem:[%s7 + $0xc] sm:$0xf]
      %v659 = vld [vmem:[%s7 + $0x10] sm:$0xf]
      %v660 = vld [vmem:[%s7 + $0x14] sm:$0xf]
      %v661 = vld [vmem:[%s7 + $0x18] sm:$0xf]
      %v662 = vld [vmem:[%s7 + $0x1c] sm:$0xf]
      %v663 = vld [vmem:[%s7 + $0x20] sm:$0xf]
      %v664 = vld [vmem:[%s7 + $0x24] sm:$0xf]
      %v665 = vld [vmem:[%s7 + $0x28] sm:$0xf]
      %v666 = vld [vmem:[%s7 + $0x2c] sm:$0xf]
      %v667 = vld [vmem:[%s7 + $0x30] sm:$0xf]
      %v668 = vld [vmem:[%s7 + $0x34] sm:$0xf]
      %v669 = vld [vmem:[%s7 + $0x38] sm:$0xf]
      %v670 = vld [vmem:[%s7 + $0x3c] sm:$0xf]
      %v687 = vunpack.c.l.b16 %v655
      %v688 = vunpack.c.l.b16 %v656
      %v689 = vunpack.c.l.b16 %v657
      %v690 = vunpack.c.l.b16 %v658
      %v691 = vunpack.c.l.b16 %v659
      %v692 = vunpack.c.l.b16 %v660
      %v693 = vunpack.c.l.b16 %v661
      %v694 = vunpack.c.l.b16 %v662
      %v695 = vunpack.c.l.b16 %v663
      %v696 = vunpack.c.l.b16 %v664
      %v697 = vunpack.c.l.b16 %v665
      %v698 = vunpack.c.l.b16 %v666
      %v699 = vunpack.c.l.b16 %v667
      %v700 = vunpack.c.l.b16 %v668
      %v701 = vunpack.c.l.b16 %v669
      %v702 = vunpack.c.l.b16 %v670
      %v703 = vpack.c.b16 %v688, %v687
      %v704 = vpack.c.b16 %v690, %v689
      %v705 = vpack.c.b16 %v692, %v691
      %v706 = vpack.c.b16 %v694, %v693
      %v707 = vpack.c.b16 %v696, %v695
      %v708 = vpack.c.b16 %v698, %v697
      %v709 = vpack.c.b16 %v700, %v699
      %v710 = vpack.c.b16 %v702, %v701
      %719 = vmatpush.bf16.msra.mxu0 %v710
      %720 = vmatpush.bf16.msra.mxu0 %v709
      %721 = vmatpush.bf16.msra.mxu0 %v708
      %722 = vmatpush.bf16.msra.mxu0 %v707
      %723 = vmatpush.bf16.msra.mxu0 %v706
      %724 = vmatpush.bf16.msra.mxu0 %v705
      %725 = vmatpush.bf16.msra.mxu0 %v704
      %726 = vmatpush.bf16.msra.mxu0 %v703
      %727 = vmatmul.bf16.gmra.mxu0 %v639
      %v728 = vpop.f32.mrf.mxu0
      %v729 = vadd.f32 0.0, %v728
      %v730 = vpop.f32.mrf.mxu0
      %v731 = vadd.f32 0.0, %v730
      %732 = vmatmul.bf16.gmra.mxu0 %v640
      %v733 = vpop.f32.mrf.mxu0
      %v734 = vadd.f32 0.0, %v733
      %v735 = vpop.f32.mrf.mxu0
      %v736 = vadd.f32 0.0, %v735
      %737 = vmatmul.bf16.gmra.mxu0 %v641
      %v738 = vpop.f32.mrf.mxu0
      %v739 = vadd.f32 0.0, %v738
      %v740 = vpop.f32.mrf.mxu0
      %v741 = vadd.f32 0.0, %v740
      %742 = vmatmul.bf16.gmra.mxu0 %v642
      %v743 = vpop.f32.mrf.mxu0
      %v744 = vadd.f32 0.0, %v743
      %v745 = vpop.f32.mrf.mxu0
      %v746 = vadd.f32 0.0, %v745
      %747 = vmatmul.bf16.gmra.mxu0 %v643
      %v748 = vpop.f32.mrf.mxu0
      %v749 = vadd.f32 0.0, %v748
      %v750 = vpop.f32.mrf.mxu0
      %v751 = vadd.f32 0.0, %v750
      %752 = vmatmul.bf16.gmra.mxu0 %v644
      %v753 = vpop.f32.mrf.mxu0
      %v754 = vadd.f32 0.0, %v753
      %v755 = vpop.f32.mrf.mxu0
      %v756 = vadd.f32 0.0, %v755
      %757 = vmatmul.bf16.gmra.mxu0 %v645
      %v758 = vpop.f32.mrf.mxu0
      %v759 = vadd.f32 0.0, %v758
      %v760 = vpop.f32.mrf.mxu0
      %v761 = vadd.f32 0.0, %v760
      %762 = vmatmul.bf16.gmra.mxu0 %v646
      %v763 = vpop.f32.mrf.mxu0
      %v764 = vadd.f32 0.0, %v763
      %v765 = vpop.f32.mrf.mxu0
      %v766 = vadd.f32 0.0, %v765
      %767 = vmatmul.bf16.gmra.mxu0 %v647
      %v768 = vpop.f32.mrf.mxu0
      %v769 = vadd.f32 0.0, %v768
      %v770 = vpop.f32.mrf.mxu0
      %v771 = vadd.f32 0.0, %v770
      %772 = vmatmul.bf16.gmra.mxu0 %v648
      %v773 = vpop.f32.mrf.mxu0
      %v774 = vadd.f32 0.0, %v773
      %v775 = vpop.f32.mrf.mxu0
      %v776 = vadd.f32 0.0, %v775
      %777 = vmatmul.bf16.gmra.mxu0 %v649
      %v778 = vpop.f32.mrf.mxu0
      %v779 = vadd.f32 0.0, %v778
      %v780 = vpop.f32.mrf.mxu0
      %v781 = vadd.f32 0.0, %v780
      %782 = vmatmul.bf16.gmra.mxu0 %v650
      %v783 = vpop.f32.mrf.mxu0
      %v784 = vadd.f32 0.0, %v783
      %v785 = vpop.f32.mrf.mxu0
      %v786 = vadd.f32 0.0, %v785
      %787 = vmatmul.bf16.gmra.mxu0 %v651
      %v788 = vpop.f32.mrf.mxu0
      %v789 = vadd.f32 0.0, %v788
      %v790 = vpop.f32.mrf.mxu0
      %v791 = vadd.f32 0.0, %v790
      %792 = vmatmul.bf16.gmra.mxu0 %v652
      %v793 = vpop.f32.mrf.mxu0
      %v794 = vadd.f32 0.0, %v793
      %v795 = vpop.f32.mrf.mxu0
      %v796 = vadd.f32 0.0, %v795
      %797 = vmatmul.bf16.gmra.mxu0 %v653
      %v798 = vpop.f32.mrf.mxu0
      %v799 = vadd.f32 0.0, %v798
      %v800 = vpop.f32.mrf.mxu0
      %v801 = vadd.f32 0.0, %v800
      %802 = vmatmul.bf16.gmra.mxu0 %v654
      %v803 = vpop.f32.mrf.mxu0
      %v804 = vadd.f32 0.0, %v803
      %v805 = vpop.f32.mrf.mxu0
      %v806 = vadd.f32 0.0, %v805
      %807 = vdwg.mxu0
      %v809 = vperm.slane %v382, 0
      %v811 = vadd.f32 %v809, %v729
      %v812 = vadd.f32 %v809, %v731
      %v813 = vadd.f32 %v809, %v734
      %v814 = vadd.f32 %v809, %v736
      %v815 = vadd.f32 %v809, %v739
      %v816 = vadd.f32 %v809, %v741
      %v817 = vadd.f32 %v809, %v744
      %v818 = vadd.f32 %v809, %v746
      %v819 = vadd.f32 %v809, %v749
      %v820 = vadd.f32 %v809, %v751
      %v821 = vadd.f32 %v809, %v754
      %v822 = vadd.f32 %v809, %v756
      %v823 = vadd.f32 %v809, %v759
      %v824 = vadd.f32 %v809, %v761
      %v825 = vadd.f32 %v809, %v764
      %v826 = vadd.f32 %v809, %v766
      %v827 = vadd.f32 %v809, %v769
      %v828 = vadd.f32 %v809, %v771
      %v829 = vadd.f32 %v809, %v774
      %v830 = vadd.f32 %v809, %v776
      %v831 = vadd.f32 %v809, %v779
      %v832 = vadd.f32 %v809, %v781
      %v833 = vadd.f32 %v809, %v784
      %v834 = vadd.f32 %v809, %v786
      %v835 = vadd.f32 %v809, %v789
      %v836 = vadd.f32 %v809, %v791
      %v837 = vadd.f32 %v809, %v794
      %v838 = vadd.f32 %v809, %v796
      %v839 = vadd.f32 %v809, %v799
      %v840 = vadd.f32 %v809, %v801
      %v841 = vadd.f32 %v809, %v804
      %v842 = vadd.f32 %v809, %v806
      %v843 = vld [vmem:[%s366] sm:$0xf]
      %v844 = vld [vmem:[%s366 + $0x4] sm:$0xf]
      %v845 = vld [vmem:[%s366 + $0x8] sm:$0xf]
      %v846 = vld [vmem:[%s366 + $0xc] sm:$0xf]
      %v847 = vld [vmem:[%s366 + $0x10] sm:$0xf]
      %v848 = vld [vmem:[%s366 + $0x14] sm:$0xf]
      %v849 = vld [vmem:[%s366 + $0x18] sm:$0xf]
      %v850 = vld [vmem:[%s366 + $0x1c] sm:$0xf]
      %v851 = vld [vmem:[%s366 + $0x20] sm:$0xf]
      %v852 = vld [vmem:[%s366 + $0x24] sm:$0xf]
      %v853 = vld [vmem:[%s366 + $0x28] sm:$0xf]
      %v854 = vld [vmem:[%s366 + $0x2c] sm:$0xf]
      %v855 = vld [vmem:[%s366 + $0x30] sm:$0xf]
      %v856 = vld [vmem:[%s366 + $0x34] sm:$0xf]
      %v857 = vld [vmem:[%s366 + $0x38] sm:$0xf]
      %v858 = vld [vmem:[%s366 + $0x3c] sm:$0xf]
      %v859 = vld [vmem:[%s366 + $0x40] sm:$0xf]
      %v860 = vld [vmem:[%s366 + $0x44] sm:$0xf]
      %v861 = vld [vmem:[%s366 + $0x48] sm:$0xf]
      %v862 = vld [vmem:[%s366 + $0x4c] sm:$0xf]
      %v863 = vld [vmem:[%s366 + $0x50] sm:$0xf]
      %v864 = vld [vmem:[%s366 + $0x54] sm:$0xf]
      %v865 = vld [vmem:[%s366 + $0x58] sm:$0xf]
      %v866 = vld [vmem:[%s366 + $0x5c] sm:$0xf]
      %v867 = vld [vmem:[%s366 + $0x60] sm:$0xf]
      %v868 = vld [vmem:[%s366 + $0x64] sm:$0xf]
      %v869 = vld [vmem:[%s366 + $0x68] sm:$0xf]
      %v870 = vld [vmem:[%s366 + $0x6c] sm:$0xf]
      %v871 = vld [vmem:[%s366 + $0x70] sm:$0xf]
      %v872 = vld [vmem:[%s366 + $0x74] sm:$0xf]
      %v873 = vld [vmem:[%s366 + $0x78] sm:$0xf]
      %v874 = vld [vmem:[%s366 + $0x7c] sm:$0xf]
      %v875 = vld [vmem:[%s4] sm:$0xf]
      %v876 = vperm.slane %v381, 1
      %v909 = vunpack.c.l.b16 %v843
      %v910 = vunpack.c.l.b16 %v844
      %v911 = vunpack.c.l.b16 %v845
      %v912 = vunpack.c.l.b16 %v846
      %v913 = vunpack.c.l.b16 %v847
      %v914 = vunpack.c.l.b16 %v848
      %v915 = vunpack.c.l.b16 %v849
      %v916 = vunpack.c.l.b16 %v850
      %v917 = vunpack.c.l.b16 %v851
      %v918 = vunpack.c.l.b16 %v852
      %v919 = vunpack.c.l.b16 %v853
      %v920 = vunpack.c.l.b16 %v854
      %v921 = vunpack.c.l.b16 %v855
      %v922 = vunpack.c.l.b16 %v856
      %v923 = vunpack.c.l.b16 %v857
      %v924 = vunpack.c.l.b16 %v858
      %v925 = vunpack.c.l.b16 %v859
      %v926 = vunpack.c.l.b16 %v860
      %v927 = vunpack.c.l.b16 %v861
      %v928 = vunpack.c.l.b16 %v862
      %v929 = vunpack.c.l.b16 %v863
      %v930 = vunpack.c.l.b16 %v864
      %v931 = vunpack.c.l.b16 %v865
      %v932 = vunpack.c.l.b16 %v866
      %v933 = vunpack.c.l.b16 %v867
      %v934 = vunpack.c.l.b16 %v868
      %v935 = vunpack.c.l.b16 %v869
      %v936 = vunpack.c.l.b16 %v870
      %v937 = vunpack.c.l.b16 %v871
      %v938 = vunpack.c.l.b16 %v872
      %v939 = vunpack.c.l.b16 %v873
      %v940 = vunpack.c.l.b16 %v874
      %v941 = vpack.c.b16 %v910, %v909
      %v942 = vpack.c.b16 %v912, %v911
      %v943 = vpack.c.b16 %v914, %v913
      %v944 = vpack.c.b16 %v916, %v915
      %v945 = vpack.c.b16 %v918, %v917
      %v946 = vpack.c.b16 %v920, %v919
      %v947 = vpack.c.b16 %v922, %v921
      %v948 = vpack.c.b16 %v924, %v923
      %v949 = vpack.c.b16 %v926, %v925
      %v950 = vpack.c.b16 %v928, %v927
      %v951 = vpack.c.b16 %v930, %v929
      %v952 = vpack.c.b16 %v932, %v931
      %v953 = vpack.c.b16 %v934, %v933
      %v954 = vpack.c.b16 %v936, %v935
      %v955 = vpack.c.b16 %v938, %v937
      %v956 = vpack.c.b16 %v940, %v939
      %vm957 = vcmask 64512
      %v959 = vsel %vm957, %v941, 0
      %v962 = vsel %vm957, %v942, 0
      %v965 = vsel %vm957, %v943, 0
      %v968 = vsel %vm957, %v944, 0
      %v971 = vsel %vm957, %v945, 0
      %v974 = vsel %vm957, %v946, 0
      %v977 = vsel %vm957, %v947, 0
      %v980 = vsel %vm957, %v948, 0
      %v983 = vsel %vm957, %v949, 0
      %v986 = vsel %vm957, %v950, 0
      %v989 = vsel %vm957, %v951, 0
      %v992 = vsel %vm957, %v952, 0
      %v995 = vsel %vm957, %v953, 0
      %v998 = vsel %vm957, %v954, 0
      %v1001 = vsel %vm957, %v955, 0
      %v1004 = vsel %vm957, %v956, 0
      %vm1006 = vcmask 1043456
      %v1008 = vsel %vm1006, %v875, 0
      %1010 = vmatpush.bf16.msra.mxu0 0
      %1011 = vmatpush.bf16.msra.mxu0 0
      %1012 = vmatpush.bf16.msra.mxu0 0
      %1013 = vmatpush.bf16.msra.mxu0 0
      %1014 = vmatpush.bf16.msra.mxu0 0
      %1015 = vmatpush.bf16.msra.mxu0 0
      %1016 = vmatpush.bf16.msra.mxu0 0
      %1017 = vmatpush.bf16.msra.mxu0 %v1008
      %1018 = vmatmul.bf16.gmra.mxu0 %v959
      %v1019 = vpop.f32.mrf.mxu0
      %v1020 = vadd.f32 %v876, %v1019
      %v1021 = vpop.f32.mrf.mxu0
      %v1022 = vadd.f32 %v876, %v1021
      %1023 = vmatmul.bf16.gmra.mxu0 %v962
      %v1024 = vpop.f32.mrf.mxu0
      %v1025 = vadd.f32 %v876, %v1024
      %v1026 = vpop.f32.mrf.mxu0
      %v1027 = vadd.f32 %v876, %v1026
      %1028 = vmatmul.bf16.gmra.mxu0 %v965
      %v1029 = vpop.f32.mrf.mxu0
      %v1030 = vadd.f32 %v876, %v1029
      %v1031 = vpop.f32.mrf.mxu0
      %v1032 = vadd.f32 %v876, %v1031
      %1033 = vmatmul.bf16.gmra.mxu0 %v968
      %v1034 = vpop.f32.mrf.mxu0
      %v1035 = vadd.f32 %v876, %v1034
      %v1036 = vpop.f32.mrf.mxu0
      %v1037 = vadd.f32 %v876, %v1036
      %1038 = vmatmul.bf16.gmra.mxu0 %v971
      %v1039 = vpop.f32.mrf.mxu0
      %v1040 = vadd.f32 %v876, %v1039
      %v1041 = vpop.f32.mrf.mxu0
      %v1042 = vadd.f32 %v876, %v1041
      %1043 = vmatmul.bf16.gmra.mxu0 %v974
      %v1044 = vpop.f32.mrf.mxu0
      %v1045 = vadd.f32 %v876, %v1044
      %v1046 = vpop.f32.mrf.mxu0
      %v1047 = vadd.f32 %v876, %v1046
      %1048 = vmatmul.bf16.gmra.mxu0 %v977
      %v1049 = vpop.f32.mrf.mxu0
      %v1050 = vadd.f32 %v876, %v1049
      %v1051 = vpop.f32.mrf.mxu0
      %v1052 = vadd.f32 %v876, %v1051
      %1053 = vmatmul.bf16.gmra.mxu0 %v980
      %v1054 = vpop.f32.mrf.mxu0
      %v1055 = vadd.f32 %v876, %v1054
      %v1056 = vpop.f32.mrf.mxu0
      %v1057 = vadd.f32 %v876, %v1056
      %1058 = vmatmul.bf16.gmra.mxu0 %v983
      %v1059 = vpop.f32.mrf.mxu0
      %v1060 = vadd.f32 %v876, %v1059
      %v1061 = vpop.f32.mrf.mxu0
      %v1062 = vadd.f32 %v876, %v1061
      %1063 = vmatmul.bf16.gmra.mxu0 %v986
      %v1064 = vpop.f32.mrf.mxu0
      %v1065 = vadd.f32 %v876, %v1064
      %v1066 = vpop.f32.mrf.mxu0
      %v1067 = vadd.f32 %v876, %v1066
      %1068 = vmatmul.bf16.gmra.mxu0 %v989
      %v1069 = vpop.f32.mrf.mxu0
      %v1070 = vadd.f32 %v876, %v1069
      %v1071 = vpop.f32.mrf.mxu0
      %v1072 = vadd.f32 %v876, %v1071
      %1073 = vmatmul.bf16.gmra.mxu0 %v992
      %v1074 = vpop.f32.mrf.mxu0
      %v1075 = vadd.f32 %v876, %v1074
      %v1076 = vpop.f32.mrf.mxu0
      %v1077 = vadd.f32 %v876, %v1076
      %1078 = vmatmul.bf16.gmra.mxu0 %v995
      %v1079 = vpop.f32.mrf.mxu0
      %v1080 = vadd.f32 %v876, %v1079
      %v1081 = vpop.f32.mrf.mxu0
      %v1082 = vadd.f32 %v876, %v1081
      %1083 = vmatmul.bf16.gmra.mxu0 %v998
      %v1084 = vpop.f32.mrf.mxu0
      %v1085 = vadd.f32 %v876, %v1084
      %v1086 = vpop.f32.mrf.mxu0
      %v1087 = vadd.f32 %v876, %v1086
      %1088 = vmatmul.bf16.gmra.mxu0 %v1001
      %v1089 = vpop.f32.mrf.mxu0
      %v1090 = vadd.f32 %v876, %v1089
      %v1091 = vpop.f32.mrf.mxu0
      %v1092 = vadd.f32 %v876, %v1091
      %1093 = vmatmul.bf16.gmra.mxu0 %v1004
      %v1094 = vpop.f32.mrf.mxu0
      %v1095 = vadd.f32 %v876, %v1094
      %v1096 = vpop.f32.mrf.mxu0
      %v1097 = vadd.f32 %v876, %v1096
      %1098 = vdwg.mxu0
      %v1099 = vpack.c.bf16 %v1022, %v1020
      %v1100 = vpack.c.bf16 %v1027, %v1025
      %v1101 = vpack.c.bf16 %v1032, %v1030
      %v1102 = vpack.c.bf16 %v1037, %v1035
      %v1103 = vpack.c.bf16 %v1042, %v1040
      %v1104 = vpack.c.bf16 %v1047, %v1045
      %v1105 = vpack.c.bf16 %v1052, %v1050
      %v1106 = vpack.c.bf16 %v1057, %v1055
      %v1107 = vpack.c.bf16 %v1062, %v1060
      %v1108 = vpack.c.bf16 %v1067, %v1065
      %v1109 = vpack.c.bf16 %v1072, %v1070
      %v1110 = vpack.c.bf16 %v1077, %v1075
      %v1111 = vpack.c.bf16 %v1082, %v1080
      %v1112 = vpack.c.bf16 %v1087, %v1085
      %v1113 = vpack.c.bf16 %v1092, %v1090
      %v1114 = vpack.c.bf16 %v1097, %v1095
      %s1115 = scalar_lea.vmem %s7, 64
      %v1116 = vld [vmem:[%s1115] sm:$0xf]
      %v1117 = vld [vmem:[%s1115 + $0x4] sm:$0xf]
      %v1118 = vld [vmem:[%s1115 + $0x8] sm:$0xf]
      %v1119 = vld [vmem:[%s1115 + $0xc] sm:$0xf]
      %v1120 = vld [vmem:[%s1115 + $0x10] sm:$0xf]
      %v1121 = vld [vmem:[%s1115 + $0x14] sm:$0xf]
      %v1122 = vld [vmem:[%s1115 + $0x18] sm:$0xf]
      %v1123 = vld [vmem:[%s1115 + $0x1c] sm:$0xf]
      %v1124 = vld [vmem:[%s1115 + $0x20] sm:$0xf]
      %v1125 = vld [vmem:[%s1115 + $0x24] sm:$0xf]
      %v1126 = vld [vmem:[%s1115 + $0x28] sm:$0xf]
      %v1127 = vld [vmem:[%s1115 + $0x2c] sm:$0xf]
      %v1128 = vld [vmem:[%s1115 + $0x30] sm:$0xf]
      %v1129 = vld [vmem:[%s1115 + $0x34] sm:$0xf]
      %v1130 = vld [vmem:[%s1115 + $0x38] sm:$0xf]
      %v1131 = vld [vmem:[%s1115 + $0x3c] sm:$0xf]
      %v1148 = vunpack.c.l.b16 %v1116
      %v1149 = vunpack.c.l.b16 %v1117
      %v1150 = vunpack.c.l.b16 %v1118
      %v1151 = vunpack.c.l.b16 %v1119
      %v1152 = vunpack.c.l.b16 %v1120
      %v1153 = vunpack.c.l.b16 %v1121
      %v1154 = vunpack.c.l.b16 %v1122
      %v1155 = vunpack.c.l.b16 %v1123
      %v1156 = vunpack.c.l.b16 %v1124
      %v1157 = vunpack.c.l.b16 %v1125
      %v1158 = vunpack.c.l.b16 %v1126
      %v1159 = vunpack.c.l.b16 %v1127
      %v1160 = vunpack.c.l.b16 %v1128
      %v1161 = vunpack.c.l.b16 %v1129
      %v1162 = vunpack.c.l.b16 %v1130
      %v1163 = vunpack.c.l.b16 %v1131
      %v1164 = vpack.c.b16 %v1149, %v1148
      %v1165 = vpack.c.b16 %v1151, %v1150
      %v1166 = vpack.c.b16 %v1153, %v1152
      %v1167 = vpack.c.b16 %v1155, %v1154
      %v1168 = vpack.c.b16 %v1157, %v1156
      %v1169 = vpack.c.b16 %v1159, %v1158
      %v1170 = vpack.c.b16 %v1161, %v1160
      %v1171 = vpack.c.b16 %v1163, %v1162
      %1180 = vmatpush.bf16.msra.mxu0 %v1171
      %1181 = vmatpush.bf16.msra.mxu0 %v1170
      %1182 = vmatpush.bf16.msra.mxu0 %v1169
      %1183 = vmatpush.bf16.msra.mxu0 %v1168
      %1184 = vmatpush.bf16.msra.mxu0 %v1167
      %1185 = vmatpush.bf16.msra.mxu0 %v1166
      %1186 = vmatpush.bf16.msra.mxu0 %v1165
      %1187 = vmatpush.bf16.msra.mxu0 %v1164
      %1188 = vmatmul.bf16.gmra.mxu0 %v1099
      %v1189 = vpop.f32.mrf.mxu0
      %v1190 = vadd.f32 0.0, %v1189
      %v1191 = vpop.f32.mrf.mxu0
      %v1192 = vadd.f32 0.0, %v1191
      %1193 = vmatmul.bf16.gmra.mxu0 %v1100
      %v1194 = vpop.f32.mrf.mxu0
      %v1195 = vadd.f32 0.0, %v1194
      %v1196 = vpop.f32.mrf.mxu0
      %v1197 = vadd.f32 0.0, %v1196
      %1198 = vmatmul.bf16.gmra.mxu0 %v1101
      %v1199 = vpop.f32.mrf.mxu0
      %v1200 = vadd.f32 0.0, %v1199
      %v1201 = vpop.f32.mrf.mxu0
      %v1202 = vadd.f32 0.0, %v1201
      %1203 = vmatmul.bf16.gmra.mxu0 %v1102
      %v1204 = vpop.f32.mrf.mxu0
      %v1205 = vadd.f32 0.0, %v1204
      %v1206 = vpop.f32.mrf.mxu0
      %v1207 = vadd.f32 0.0, %v1206
      %1208 = vmatmul.bf16.gmra.mxu0 %v1103
      %v1209 = vpop.f32.mrf.mxu0
      %v1210 = vadd.f32 0.0, %v1209
      %v1211 = vpop.f32.mrf.mxu0
      %v1212 = vadd.f32 0.0, %v1211
      %1213 = vmatmul.bf16.gmra.mxu0 %v1104
      %v1214 = vpop.f32.mrf.mxu0
      %v1215 = vadd.f32 0.0, %v1214
      %v1216 = vpop.f32.mrf.mxu0
      %v1217 = vadd.f32 0.0, %v1216
      %1218 = vmatmul.bf16.gmra.mxu0 %v1105
      %v1219 = vpop.f32.mrf.mxu0
      %v1220 = vadd.f32 0.0, %v1219
      %v1221 = vpop.f32.mrf.mxu0
      %v1222 = vadd.f32 0.0, %v1221
      %1223 = vmatmul.bf16.gmra.mxu0 %v1106
      %v1224 = vpop.f32.mrf.mxu0
      %v1225 = vadd.f32 0.0, %v1224
      %v1226 = vpop.f32.mrf.mxu0
      %v1227 = vadd.f32 0.0, %v1226
      %1228 = vmatmul.bf16.gmra.mxu0 %v1107
      %v1229 = vpop.f32.mrf.mxu0
      %v1230 = vadd.f32 0.0, %v1229
      %v1231 = vpop.f32.mrf.mxu0
      %v1232 = vadd.f32 0.0, %v1231
      %1233 = vmatmul.bf16.gmra.mxu0 %v1108
      %v1234 = vpop.f32.mrf.mxu0
      %v1235 = vadd.f32 0.0, %v1234
      %v1236 = vpop.f32.mrf.mxu0
      %v1237 = vadd.f32 0.0, %v1236
      %1238 = vmatmul.bf16.gmra.mxu0 %v1109
      %v1239 = vpop.f32.mrf.mxu0
      %v1240 = vadd.f32 0.0, %v1239
      %v1241 = vpop.f32.mrf.mxu0
      %v1242 = vadd.f32 0.0, %v1241
      %1243 = vmatmul.bf16.gmra.mxu0 %v1110
      %v1244 = vpop.f32.mrf.mxu0
      %v1245 = vadd.f32 0.0, %v1244
      %v1246 = vpop.f32.mrf.mxu0
      %v1247 = vadd.f32 0.0, %v1246
      %1248 = vmatmul.bf16.gmra.mxu0 %v1111
      %v1249 = vpop.f32.mrf.mxu0
      %v1250 = vadd.f32 0.0, %v1249
      %v1251 = vpop.f32.mrf.mxu0
      %v1252 = vadd.f32 0.0, %v1251
      %1253 = vmatmul.bf16.gmra.mxu0 %v1112
      %v1254 = vpop.f32.mrf.mxu0
      %v1255 = vadd.f32 0.0, %v1254
      %v1256 = vpop.f32.mrf.mxu0
      %v1257 = vadd.f32 0.0, %v1256
      %1258 = vmatmul.bf16.gmra.mxu0 %v1113
      %v1259 = vpop.f32.mrf.mxu0
      %v1260 = vadd.f32 0.0, %v1259
      %v1261 = vpop.f32.mrf.mxu0
      %v1262 = vadd.f32 0.0, %v1261
      %1263 = vmatmul.bf16.gmra.mxu0 %v1114
      %v1264 = vpop.f32.mrf.mxu0
      %v1265 = vadd.f32 0.0, %v1264
      %v1266 = vpop.f32.mrf.mxu0
      %v1267 = vadd.f32 0.0, %v1266
      %1268 = vdwg.mxu0
      %v1269 = vadd.f32 %v811, %v1190
      %v1270 = vadd.f32 %v812, %v1192
      %v1271 = vadd.f32 %v813, %v1195
      %v1272 = vadd.f32 %v814, %v1197
      %v1273 = vadd.f32 %v815, %v1200
      %v1274 = vadd.f32 %v816, %v1202
      %v1275 = vadd.f32 %v817, %v1205
      %v1276 = vadd.f32 %v818, %v1207
      %v1277 = vadd.f32 %v819, %v1210
      %v1278 = vadd.f32 %v820, %v1212
      %v1279 = vadd.f32 %v821, %v1215
      %v1280 = vadd.f32 %v822, %v1217
      %v1281 = vadd.f32 %v823, %v1220
      %v1282 = vadd.f32 %v824, %v1222
      %v1283 = vadd.f32 %v825, %v1225
      %v1284 = vadd.f32 %v826, %v1227
      %v1285 = vadd.f32 %v827, %v1230
      %v1286 = vadd.f32 %v828, %v1232
      %v1287 = vadd.f32 %v829, %v1235
      %v1288 = vadd.f32 %v830, %v1237
      %v1289 = vadd.f32 %v831, %v1240
      %v1290 = vadd.f32 %v832, %v1242
      %v1291 = vadd.f32 %v833, %v1245
      %v1292 = vadd.f32 %v834, %v1247
      %v1293 = vadd.f32 %v835, %v1250
      %v1294 = vadd.f32 %v836, %v1252
      %v1295 = vadd.f32 %v837, %v1255
      %v1296 = vadd.f32 %v838, %v1257
      %v1297 = vadd.f32 %v839, %v1260
      %v1298 = vadd.f32 %v840, %v1262
      %v1299 = vadd.f32 %v841, %v1265
      %v1300 = vadd.f32 %v842, %v1267
      %v1301 = vld [vmem:[%s372] sm:$0xf]
      %v1302 = vld [vmem:[%s372 + $0x4] sm:$0xf]
      %v1303 = vld [vmem:[%s372 + $0x8] sm:$0xf]
      %v1304 = vld [vmem:[%s372 + $0xc] sm:$0xf]
      %v1305 = vld [vmem:[%s372 + $0x10] sm:$0xf]
      %v1306 = vld [vmem:[%s372 + $0x14] sm:$0xf]
      %v1307 = vld [vmem:[%s372 + $0x18] sm:$0xf]
      %v1308 = vld [vmem:[%s372 + $0x1c] sm:$0xf]
      %v1309 = vld [vmem:[%s372 + $0x20] sm:$0xf]
      %v1310 = vld [vmem:[%s372 + $0x24] sm:$0xf]
      %v1311 = vld [vmem:[%s372 + $0x28] sm:$0xf]
      %v1312 = vld [vmem:[%s372 + $0x2c] sm:$0xf]
      %v1313 = vld [vmem:[%s372 + $0x30] sm:$0xf]
      %v1314 = vld [vmem:[%s372 + $0x34] sm:$0xf]
      %v1315 = vld [vmem:[%s372 + $0x38] sm:$0xf]
      %v1316 = vld [vmem:[%s372 + $0x3c] sm:$0xf]
      %v1317 = vld [vmem:[%s372 + $0x40] sm:$0xf]
      %v1318 = vld [vmem:[%s372 + $0x44] sm:$0xf]
      %v1319 = vld [vmem:[%s372 + $0x48] sm:$0xf]
      %v1320 = vld [vmem:[%s372 + $0x4c] sm:$0xf]
      %v1321 = vld [vmem:[%s372 + $0x50] sm:$0xf]
      %v1322 = vld [vmem:[%s372 + $0x54] sm:$0xf]
      %v1323 = vld [vmem:[%s372 + $0x58] sm:$0xf]
      %v1324 = vld [vmem:[%s372 + $0x5c] sm:$0xf]
      %v1325 = vld [vmem:[%s372 + $0x60] sm:$0xf]
      %v1326 = vld [vmem:[%s372 + $0x64] sm:$0xf]
      %v1327 = vld [vmem:[%s372 + $0x68] sm:$0xf]
      %v1328 = vld [vmem:[%s372 + $0x6c] sm:$0xf]
      %v1329 = vld [vmem:[%s372 + $0x70] sm:$0xf]
      %v1330 = vld [vmem:[%s372 + $0x74] sm:$0xf]
      %v1331 = vld [vmem:[%s372 + $0x78] sm:$0xf]
      %v1332 = vld [vmem:[%s372 + $0x7c] sm:$0xf]
      %v1333 = vld [vmem:[%s5] sm:$0xf]
      %v1334 = vld [vmem:[%s5 + $0x4] sm:$0xf]
      %v1335 = vperm.slane %v381, 2
      %v1368 = vunpack.c.l.b16 %v1301
      %v1369 = vunpack.c.l.b16 %v1302
      %v1370 = vunpack.c.l.b16 %v1303
      %v1371 = vunpack.c.l.b16 %v1304
      %v1372 = vunpack.c.l.b16 %v1305
      %v1373 = vunpack.c.l.b16 %v1306
      %v1374 = vunpack.c.l.b16 %v1307
      %v1375 = vunpack.c.l.b16 %v1308
      %v1376 = vunpack.c.l.b16 %v1309
      %v1377 = vunpack.c.l.b16 %v1310
      %v1378 = vunpack.c.l.b16 %v1311
      %v1379 = vunpack.c.l.b16 %v1312
      %v1380 = vunpack.c.l.b16 %v1313
      %v1381 = vunpack.c.l.b16 %v1314
      %v1382 = vunpack.c.l.b16 %v1315
      %v1383 = vunpack.c.l.b16 %v1316
      %v1384 = vunpack.c.l.b16 %v1317
      %v1385 = vunpack.c.l.b16 %v1318
      %v1386 = vunpack.c.l.b16 %v1319
      %v1387 = vunpack.c.l.b16 %v1320
      %v1388 = vunpack.c.l.b16 %v1321
      %v1389 = vunpack.c.l.b16 %v1322
      %v1390 = vunpack.c.l.b16 %v1323
      %v1391 = vunpack.c.l.b16 %v1324
      %v1392 = vunpack.c.l.b16 %v1325
      %v1393 = vunpack.c.l.b16 %v1326
      %v1394 = vunpack.c.l.b16 %v1327
      %v1395 = vunpack.c.l.b16 %v1328
      %v1396 = vunpack.c.l.b16 %v1329
      %v1397 = vunpack.c.l.b16 %v1330
      %v1398 = vunpack.c.l.b16 %v1331
      %v1399 = vunpack.c.l.b16 %v1332
      %v1400 = vpack.c.b16 %v1369, %v1368
      %v1401 = vpack.c.b16 %v1371, %v1370
      %v1402 = vpack.c.b16 %v1373, %v1372
      %v1403 = vpack.c.b16 %v1375, %v1374
      %v1404 = vpack.c.b16 %v1377, %v1376
      %v1405 = vpack.c.b16 %v1379, %v1378
      %v1406 = vpack.c.b16 %v1381, %v1380
      %v1407 = vpack.c.b16 %v1383, %v1382
      %v1408 = vpack.c.b16 %v1385, %v1384
      %v1409 = vpack.c.b16 %v1387, %v1386
      %v1410 = vpack.c.b16 %v1389, %v1388
      %v1411 = vpack.c.b16 %v1391, %v1390
      %v1412 = vpack.c.b16 %v1393, %v1392
      %v1413 = vpack.c.b16 %v1395, %v1394
      %v1414 = vpack.c.b16 %v1397, %v1396
      %v1415 = vpack.c.b16 %v1399, %v1398
      %v1418 = vunpack.c.l.b16 %v1333
      %v1419 = vunpack.c.l.b16 %v1334
      %v1420 = vpack.c.b16 %v1419, %v1418
      %vm1422 = vcmask 130048
      %v1424 = vsel %vm1422, %v1400, 0
      %v1427 = vsel %vm1422, %v1401, 0
      %v1430 = vsel %vm1422, %v1402, 0
      %v1433 = vsel %vm1422, %v1403, 0
      %v1436 = vsel %vm1422, %v1404, 0
      %v1439 = vsel %vm1422, %v1405, 0
      %v1442 = vsel %vm1422, %v1406, 0
      %v1445 = vsel %vm1422, %v1407, 0
      %v1448 = vsel %vm1422, %v1408, 0
      %v1451 = vsel %vm1422, %v1409, 0
      %v1454 = vsel %vm1422, %v1410, 0
      %v1457 = vsel %vm1422, %v1411, 0
      %v1460 = vsel %vm1422, %v1412, 0
      %v1463 = vsel %vm1422, %v1413, 0
      %v1466 = vsel %vm1422, %v1414, 0
      %v1469 = vsel %vm1422, %v1415, 0
      %1471 = vmatpush.bf16.msra.mxu0 0
      %1472 = vmatpush.bf16.msra.mxu0 0
      %1473 = vmatpush.bf16.msra.mxu0 0
      %1474 = vmatpush.bf16.msra.mxu0 0
      %1475 = vmatpush.bf16.msra.mxu0 0
      %1476 = vmatpush.bf16.msra.mxu0 0
      %1477 = vmatpush.bf16.msra.mxu0 0
      %1478 = vmatpush.bf16.msra.mxu0 %v1420
      %1479 = vmatmul.bf16.gmra.mxu0 %v1424
      %v1480 = vpop.f32.mrf.mxu0
      %v1481 = vadd.f32 %v1335, %v1480
      %v1482 = vpop.f32.mrf.mxu0
      %v1483 = vadd.f32 %v1335, %v1482
      %1484 = vmatmul.bf16.gmra.mxu0 %v1427
      %v1485 = vpop.f32.mrf.mxu0
      %v1486 = vadd.f32 %v1335, %v1485
      %v1487 = vpop.f32.mrf.mxu0
      %v1488 = vadd.f32 %v1335, %v1487
      %1489 = vmatmul.bf16.gmra.mxu0 %v1430
      %v1490 = vpop.f32.mrf.mxu0
      %v1491 = vadd.f32 %v1335, %v1490
      %v1492 = vpop.f32.mrf.mxu0
      %v1493 = vadd.f32 %v1335, %v1492
      %1494 = vmatmul.bf16.gmra.mxu0 %v1433
      %v1495 = vpop.f32.mrf.mxu0
      %v1496 = vadd.f32 %v1335, %v1495
      %v1497 = vpop.f32.mrf.mxu0
      %v1498 = vadd.f32 %v1335, %v1497
      %1499 = vmatmul.bf16.gmra.mxu0 %v1436
      %v1500 = vpop.f32.mrf.mxu0
      %v1501 = vadd.f32 %v1335, %v1500
      %v1502 = vpop.f32.mrf.mxu0
      %v1503 = vadd.f32 %v1335, %v1502
      %1504 = vmatmul.bf16.gmra.mxu0 %v1439
      %v1505 = vpop.f32.mrf.mxu0
      %v1506 = vadd.f32 %v1335, %v1505
      %v1507 = vpop.f32.mrf.mxu0
      %v1508 = vadd.f32 %v1335, %v1507
      %1509 = vmatmul.bf16.gmra.mxu0 %v1442
      %v1510 = vpop.f32.mrf.mxu0
      %v1511 = vadd.f32 %v1335, %v1510
      %v1512 = vpop.f32.mrf.mxu0
      %v1513 = vadd.f32 %v1335, %v1512
      %1514 = vmatmul.bf16.gmra.mxu0 %v1445
      %v1515 = vpop.f32.mrf.mxu0
      %v1516 = vadd.f32 %v1335, %v1515
      %v1517 = vpop.f32.mrf.mxu0
      %v1518 = vadd.f32 %v1335, %v1517
      %1519 = vmatmul.bf16.gmra.mxu0 %v1448
      %v1520 = vpop.f32.mrf.mxu0
      %v1521 = vadd.f32 %v1335, %v1520
      %v1522 = vpop.f32.mrf.mxu0
      %v1523 = vadd.f32 %v1335, %v1522
      %1524 = vmatmul.bf16.gmra.mxu0 %v1451
      %v1525 = vpop.f32.mrf.mxu0
      %v1526 = vadd.f32 %v1335, %v1525
      %v1527 = vpop.f32.mrf.mxu0
      %v1528 = vadd.f32 %v1335, %v1527
      %1529 = vmatmul.bf16.gmra.mxu0 %v1454
      %v1530 = vpop.f32.mrf.mxu0
      %v1531 = vadd.f32 %v1335, %v1530
      %v1532 = vpop.f32.mrf.mxu0
      %v1533 = vadd.f32 %v1335, %v1532
      %1534 = vmatmul.bf16.gmra.mxu0 %v1457
      %v1535 = vpop.f32.mrf.mxu0
      %v1536 = vadd.f32 %v1335, %v1535
      %v1537 = vpop.f32.mrf.mxu0
      %v1538 = vadd.f32 %v1335, %v1537
      %1539 = vmatmul.bf16.gmra.mxu0 %v1460
      %v1540 = vpop.f32.mrf.mxu0
      %v1541 = vadd.f32 %v1335, %v1540
      %v1542 = vpop.f32.mrf.mxu0
      %v1543 = vadd.f32 %v1335, %v1542
      %1544 = vmatmul.bf16.gmra.mxu0 %v1463
      %v1545 = vpop.f32.mrf.mxu0
      %v1546 = vadd.f32 %v1335, %v1545
      %v1547 = vpop.f32.mrf.mxu0
      %v1548 = vadd.f32 %v1335, %v1547
      %1549 = vmatmul.bf16.gmra.mxu0 %v1466
      %v1550 = vpop.f32.mrf.mxu0
      %v1551 = vadd.f32 %v1335, %v1550
      %v1552 = vpop.f32.mrf.mxu0
      %v1553 = vadd.f32 %v1335, %v1552
      %1554 = vmatmul.bf16.gmra.mxu0 %v1469
      %v1555 = vpop.f32.mrf.mxu0
      %v1556 = vadd.f32 %v1335, %v1555
      %v1557 = vpop.f32.mrf.mxu0
      %v1558 = vadd.f32 %v1335, %v1557
      %1559 = vdwg.mxu0
      %v1560 = vpack.c.bf16 %v1483, %v1481
      %v1561 = vpack.c.bf16 %v1488, %v1486
      %v1562 = vpack.c.bf16 %v1493, %v1491
      %v1563 = vpack.c.bf16 %v1498, %v1496
      %v1564 = vpack.c.bf16 %v1503, %v1501
      %v1565 = vpack.c.bf16 %v1508, %v1506
      %v1566 = vpack.c.bf16 %v1513, %v1511
      %v1567 = vpack.c.bf16 %v1518, %v1516
      %v1568 = vpack.c.bf16 %v1523, %v1521
      %v1569 = vpack.c.bf16 %v1528, %v1526
      %v1570 = vpack.c.bf16 %v1533, %v1531
      %v1571 = vpack.c.bf16 %v1538, %v1536
      %v1572 = vpack.c.bf16 %v1543, %v1541
      %v1573 = vpack.c.bf16 %v1548, %v1546
      %v1574 = vpack.c.bf16 %v1553, %v1551
      %v1575 = vpack.c.bf16 %v1558, %v1556
      %s1576 = scalar_lea.vmem %s7, 128
      %v1577 = vld [vmem:[%s1576] sm:$0xf]
      %v1578 = vld [vmem:[%s1576 + $0x4] sm:$0xf]
      %v1579 = vld [vmem:[%s1576 + $0x8] sm:$0xf]
      %v1580 = vld [vmem:[%s1576 + $0xc] sm:$0xf]
      %v1581 = vld [vmem:[%s1576 + $0x10] sm:$0xf]
      %v1582 = vld [vmem:[%s1576 + $0x14] sm:$0xf]
      %v1583 = vld [vmem:[%s1576 + $0x18] sm:$0xf]
      %v1584 = vld [vmem:[%s1576 + $0x1c] sm:$0xf]
      %v1585 = vld [vmem:[%s1576 + $0x20] sm:$0xf]
      %v1586 = vld [vmem:[%s1576 + $0x24] sm:$0xf]
      %v1587 = vld [vmem:[%s1576 + $0x28] sm:$0xf]
      %v1588 = vld [vmem:[%s1576 + $0x2c] sm:$0xf]
      %v1589 = vld [vmem:[%s1576 + $0x30] sm:$0xf]
      %v1590 = vld [vmem:[%s1576 + $0x34] sm:$0xf]
      %v1591 = vld [vmem:[%s1576 + $0x38] sm:$0xf]
      %v1592 = vld [vmem:[%s1576 + $0x3c] sm:$0xf]
      %v1609 = vunpack.c.l.b16 %v1577
      %v1610 = vunpack.c.l.b16 %v1578
      %v1611 = vunpack.c.l.b16 %v1579
      %v1612 = vunpack.c.l.b16 %v1580
      %v1613 = vunpack.c.l.b16 %v1581
      %v1614 = vunpack.c.l.b16 %v1582
      %v1615 = vunpack.c.l.b16 %v1583
      %v1616 = vunpack.c.l.b16 %v1584
      %v1617 = vunpack.c.l.b16 %v1585
      %v1618 = vunpack.c.l.b16 %v1586
      %v1619 = vunpack.c.l.b16 %v1587
      %v1620 = vunpack.c.l.b16 %v1588
      %v1621 = vunpack.c.l.b16 %v1589
      %v1622 = vunpack.c.l.b16 %v1590
      %v1623 = vunpack.c.l.b16 %v1591
      %v1624 = vunpack.c.l.b16 %v1592
      %v1625 = vpack.c.b16 %v1610, %v1609
      %v1626 = vpack.c.b16 %v1612, %v1611
      %v1627 = vpack.c.b16 %v1614, %v1613
      %v1628 = vpack.c.b16 %v1616, %v1615
      %v1629 = vpack.c.b16 %v1618, %v1617
      %v1630 = vpack.c.b16 %v1620, %v1619
      %v1631 = vpack.c.b16 %v1622, %v1621
      %v1632 = vpack.c.b16 %v1624, %v1623
      %1641 = vmatpush.bf16.msra.mxu0 %v1632
      %1642 = vmatpush.bf16.msra.mxu0 %v1631
      %1643 = vmatpush.bf16.msra.mxu0 %v1630
      %1644 = vmatpush.bf16.msra.mxu0 %v1629
      %1645 = vmatpush.bf16.msra.mxu0 %v1628
      %1646 = vmatpush.bf16.msra.mxu0 %v1627
      %1647 = vmatpush.bf16.msra.mxu0 %v1626
      %1648 = vmatpush.bf16.msra.mxu0 %v1625
      %1649 = vmatmul.bf16.gmra.mxu0 %v1560
      %v1650 = vpop.f32.mrf.mxu0
      %v1651 = vadd.f32 0.0, %v1650
      %v1652 = vpop.f32.mrf.mxu0
      %v1653 = vadd.f32 0.0, %v1652
      %1654 = vmatmul.bf16.gmra.mxu0 %v1561
      %v1655 = vpop.f32.mrf.mxu0
      %v1656 = vadd.f32 0.0, %v1655
      %v1657 = vpop.f32.mrf.mxu0
      %v1658 = vadd.f32 0.0, %v1657
      %1659 = vmatmul.bf16.gmra.mxu0 %v1562
      %v1660 = vpop.f32.mrf.mxu0
      %v1661 = vadd.f32 0.0, %v1660
      %v1662 = vpop.f32.mrf.mxu0
      %v1663 = vadd.f32 0.0, %v1662
      %1664 = vmatmul.bf16.gmra.mxu0 %v1563
      %v1665 = vpop.f32.mrf.mxu0
      %v1666 = vadd.f32 0.0, %v1665
      %v1667 = vpop.f32.mrf.mxu0
      %v1668 = vadd.f32 0.0, %v1667
      %1669 = vmatmul.bf16.gmra.mxu0 %v1564
      %v1670 = vpop.f32.mrf.mxu0
      %v1671 = vadd.f32 0.0, %v1670
      %v1672 = vpop.f32.mrf.mxu0
      %v1673 = vadd.f32 0.0, %v1672
      %1674 = vmatmul.bf16.gmra.mxu0 %v1565
      %v1675 = vpop.f32.mrf.mxu0
      %v1676 = vadd.f32 0.0, %v1675
      %v1677 = vpop.f32.mrf.mxu0
      %v1678 = vadd.f32 0.0, %v1677
      %1679 = vmatmul.bf16.gmra.mxu0 %v1566
      %v1680 = vpop.f32.mrf.mxu0
      %v1681 = vadd.f32 0.0, %v1680
      %v1682 = vpop.f32.mrf.mxu0
      %v1683 = vadd.f32 0.0, %v1682
      %1684 = vmatmul.bf16.gmra.mxu0 %v1567
      %v1685 = vpop.f32.mrf.mxu0
      %v1686 = vadd.f32 0.0, %v1685
      %v1687 = vpop.f32.mrf.mxu0
      %v1688 = vadd.f32 0.0, %v1687
      %1689 = vmatmul.bf16.gmra.mxu0 %v1568
      %v1690 = vpop.f32.mrf.mxu0
      %v1691 = vadd.f32 0.0, %v1690
      %v1692 = vpop.f32.mrf.mxu0
      %v1693 = vadd.f32 0.0, %v1692
      %1694 = vmatmul.bf16.gmra.mxu0 %v1569
      %v1695 = vpop.f32.mrf.mxu0
      %v1696 = vadd.f32 0.0, %v1695
      %v1697 = vpop.f32.mrf.mxu0
      %v1698 = vadd.f32 0.0, %v1697
      %1699 = vmatmul.bf16.gmra.mxu0 %v1570
      %v1700 = vpop.f32.mrf.mxu0
      %v1701 = vadd.f32 0.0, %v1700
      %v1702 = vpop.f32.mrf.mxu0
      %v1703 = vadd.f32 0.0, %v1702
      %1704 = vmatmul.bf16.gmra.mxu0 %v1571
      %v1705 = vpop.f32.mrf.mxu0
      %v1706 = vadd.f32 0.0, %v1705
      %v1707 = vpop.f32.mrf.mxu0
      %v1708 = vadd.f32 0.0, %v1707
      %1709 = vmatmul.bf16.gmra.mxu0 %v1572
      %v1710 = vpop.f32.mrf.mxu0
      %v1711 = vadd.f32 0.0, %v1710
      %v1712 = vpop.f32.mrf.mxu0
      %v1713 = vadd.f32 0.0, %v1712
      %1714 = vmatmul.bf16.gmra.mxu0 %v1573
      %v1715 = vpop.f32.mrf.mxu0
      %v1716 = vadd.f32 0.0, %v1715
      %v1717 = vpop.f32.mrf.mxu0
      %v1718 = vadd.f32 0.0, %v1717
      %1719 = vmatmul.bf16.gmra.mxu0 %v1574
      %v1720 = vpop.f32.mrf.mxu0
      %v1721 = vadd.f32 0.0, %v1720
      %v1722 = vpop.f32.mrf.mxu0
      %v1723 = vadd.f32 0.0, %v1722
      %1724 = vmatmul.bf16.gmra.mxu0 %v1575
      %v1725 = vpop.f32.mrf.mxu0
      %v1726 = vadd.f32 0.0, %v1725
      %v1727 = vpop.f32.mrf.mxu0
      %v1728 = vadd.f32 0.0, %v1727
      %1729 = vdwg.mxu0
      %v1730 = vadd.f32 %v1269, %v1651
      %v1731 = vadd.f32 %v1270, %v1653
      %v1732 = vadd.f32 %v1271, %v1656
      %v1733 = vadd.f32 %v1272, %v1658
      %v1734 = vadd.f32 %v1273, %v1661
      %v1735 = vadd.f32 %v1274, %v1663
      %v1736 = vadd.f32 %v1275, %v1666
      %v1737 = vadd.f32 %v1276, %v1668
      %v1738 = vadd.f32 %v1277, %v1671
      %v1739 = vadd.f32 %v1278, %v1673
      %v1740 = vadd.f32 %v1279, %v1676
      %v1741 = vadd.f32 %v1280, %v1678
      %v1742 = vadd.f32 %v1281, %v1681
      %v1743 = vadd.f32 %v1282, %v1683
      %v1744 = vadd.f32 %v1283, %v1686
      %v1745 = vadd.f32 %v1284, %v1688
      %v1746 = vadd.f32 %v1285, %v1691
      %v1747 = vadd.f32 %v1286, %v1693
      %v1748 = vadd.f32 %v1287, %v1696
      %v1749 = vadd.f32 %v1288, %v1698
      %v1750 = vadd.f32 %v1289, %v1701
      %v1751 = vadd.f32 %v1290, %v1703
      %v1752 = vadd.f32 %v1291, %v1706
      %v1753 = vadd.f32 %v1292, %v1708
      %v1754 = vadd.f32 %v1293, %v1711
      %v1755 = vadd.f32 %v1294, %v1713
      %v1756 = vadd.f32 %v1295, %v1716
      %v1757 = vadd.f32 %v1296, %v1718
      %v1758 = vadd.f32 %v1297, %v1721
      %v1759 = vadd.f32 %v1298, %v1723
      %v1760 = vadd.f32 %v1299, %v1726
      %v1761 = vadd.f32 %v1300, %v1728
      %1762 = vmax.xlane.f32.xlu0 %v1730
      %v1763 = vpop.xlane.xlu0 %1762
      %1764 = vmax.xlane.f32.xlu0 %v1731
      %v1765 = vpop.xlane.xlu0 %1764
      %1766 = vmax.xlane.f32.xlu0 %v1732
      %v1767 = vpop.xlane.xlu0 %1766
      %1768 = vmax.xlane.f32.xlu0 %v1733
      %v1769 = vpop.xlane.xlu0 %1768
      %1770 = vmax.xlane.f32.xlu0 %v1734
      %v1771 = vpop.xlane.xlu0 %1770
      %1772 = vmax.xlane.f32.xlu0 %v1735
      %v1773 = vpop.xlane.xlu0 %1772
      %1774 = vmax.xlane.f32.xlu0 %v1736
      %v1775 = vpop.xlane.xlu0 %1774
      %1776 = vmax.xlane.f32.xlu0 %v1737
      %v1777 = vpop.xlane.xlu0 %1776
      %1778 = vmax.xlane.f32.xlu0 %v1738
      %v1779 = vpop.xlane.xlu0 %1778
      %1780 = vmax.xlane.f32.xlu0 %v1739
      %v1781 = vpop.xlane.xlu0 %1780
      %1782 = vmax.xlane.f32.xlu0 %v1740
      %v1783 = vpop.xlane.xlu0 %1782
      %1784 = vmax.xlane.f32.xlu0 %v1741
      %v1785 = vpop.xlane.xlu0 %1784
      %1786 = vmax.xlane.f32.xlu0 %v1742
      %v1787 = vpop.xlane.xlu0 %1786
      %1788 = vmax.xlane.f32.xlu0 %v1743
      %v1789 = vpop.xlane.xlu0 %1788
      %1790 = vmax.xlane.f32.xlu0 %v1744
      %v1791 = vpop.xlane.xlu0 %1790
      %1792 = vmax.xlane.f32.xlu0 %v1745
      %v1793 = vpop.xlane.xlu0 %1792
      %1794 = vmax.xlane.f32.xlu0 %v1746
      %v1795 = vpop.xlane.xlu0 %1794
      %1796 = vmax.xlane.f32.xlu0 %v1747
      %v1797 = vpop.xlane.xlu0 %1796
      %1798 = vmax.xlane.f32.xlu0 %v1748
      %v1799 = vpop.xlane.xlu0 %1798
      %1800 = vmax.xlane.f32.xlu0 %v1749
      %v1801 = vpop.xlane.xlu0 %1800
      %1802 = vmax.xlane.f32.xlu0 %v1750
      %v1803 = vpop.xlane.xlu0 %1802
      %1804 = vmax.xlane.f32.xlu0 %v1751
      %v1805 = vpop.xlane.xlu0 %1804
      %1806 = vmax.xlane.f32.xlu0 %v1752
      %v1807 = vpop.xlane.xlu0 %1806
      %1808 = vmax.xlane.f32.xlu0 %v1753
      %v1809 = vpop.xlane.xlu0 %1808
      %1810 = vmax.xlane.f32.xlu0 %v1754
      %v1811 = vpop.xlane.xlu0 %1810
      %1812 = vmax.xlane.f32.xlu0 %v1755
      %v1813 = vpop.xlane.xlu0 %1812
      %1814 = vmax.xlane.f32.xlu0 %v1756
      %v1815 = vpop.xlane.xlu0 %1814
      %1816 = vmax.xlane.f32.xlu0 %v1757
      %v1817 = vpop.xlane.xlu0 %1816
      %1818 = vmax.xlane.f32.xlu0 %v1758
      %v1819 = vpop.xlane.xlu0 %1818
      %1820 = vmax.xlane.f32.xlu0 %v1759
      %v1821 = vpop.xlane.xlu0 %1820
      %1822 = vmax.xlane.f32.xlu0 %v1760
      %v1823 = vpop.xlane.xlu0 %1822
      %1824 = vmax.xlane.f32.xlu0 %v1761
      %v1825 = vpop.xlane.xlu0 %1824
      %v1826 = vsub.f32 %v1730, %v1763
      %v1827 = vsub.f32 %v1731, %v1765
      %v1828 = vsub.f32 %v1732, %v1767
      %v1829 = vsub.f32 %v1733, %v1769
      %v1830 = vsub.f32 %v1734, %v1771
      %v1831 = vsub.f32 %v1735, %v1773
      %v1832 = vsub.f32 %v1736, %v1775
      %v1833 = vsub.f32 %v1737, %v1777
      %v1834 = vsub.f32 %v1738, %v1779
      %v1835 = vsub.f32 %v1739, %v1781
      %v1836 = vsub.f32 %v1740, %v1783
      %v1837 = vsub.f32 %v1741, %v1785
      %v1838 = vsub.f32 %v1742, %v1787
      %v1839 = vsub.f32 %v1743, %v1789
      %v1840 = vsub.f32 %v1744, %v1791
      %v1841 = vsub.f32 %v1745, %v1793
      %v1842 = vsub.f32 %v1746, %v1795
      %v1843 = vsub.f32 %v1747, %v1797
      %v1844 = vsub.f32 %v1748, %v1799
      %v1845 = vsub.f32 %v1749, %v1801
      %v1846 = vsub.f32 %v1750, %v1803
      %v1847 = vsub.f32 %v1751, %v1805
      %v1848 = vsub.f32 %v1752, %v1807
      %v1849 = vsub.f32 %v1753, %v1809
      %v1850 = vsub.f32 %v1754, %v1811
      %v1851 = vsub.f32 %v1755, %v1813
      %v1852 = vsub.f32 %v1756, %v1815
      %v1853 = vsub.f32 %v1757, %v1817
      %v1854 = vsub.f32 %v1758, %v1819
      %v1855 = vsub.f32 %v1759, %v1821
      %v1856 = vsub.f32 %v1760, %v1823
      %v1857 = vsub.f32 %v1761, %v1825
      %v1858 = vmul.f32 %v1826, 1.442695
      %v1859 = vpow.pop %v1858
      %v1860 = vmul.f32 %v1827, 1.442695
      %v1861 = vpow.pop %v1860
      %v1862 = vmul.f32 %v1828, 1.442695
      %v1863 = vpow.pop %v1862
      %v1864 = vmul.f32 %v1829, 1.442695
      %v1865 = vpow.pop %v1864
      %v1866 = vmul.f32 %v1830, 1.442695
      %v1867 = vpow.pop %v1866
      %v1868 = vmul.f32 %v1831, 1.442695
      %v1869 = vpow.pop %v1868
      %v1870 = vmul.f32 %v1832, 1.442695
      %v1871 = vpow.pop %v1870
      %v1872 = vmul.f32 %v1833, 1.442695
      %v1873 = vpow.pop %v1872
      %v1874 = vmul.f32 %v1834, 1.442695
      %v1875 = vpow.pop %v1874
      %v1876 = vmul.f32 %v1835, 1.442695
      %v1877 = vpow.pop %v1876
      %v1878 = vmul.f32 %v1836, 1.442695
      %v1879 = vpow.pop %v1878
      %v1880 = vmul.f32 %v1837, 1.442695
      %v1881 = vpow.pop %v1880
      %v1882 = vmul.f32 %v1838, 1.442695
      %v1883 = vpow.pop %v1882
      %v1884 = vmul.f32 %v1839, 1.442695
      %v1885 = vpow.pop %v1884
      %v1886 = vmul.f32 %v1840, 1.442695
      %v1887 = vpow.pop %v1886
      %v1888 = vmul.f32 %v1841, 1.442695
      %v1889 = vpow.pop %v1888
      %v1890 = vmul.f32 %v1842, 1.442695
      %v1891 = vpow.pop %v1890
      %v1892 = vmul.f32 %v1843, 1.442695
      %v1893 = vpow.pop %v1892
      %v1894 = vmul.f32 %v1844, 1.442695
      %v1895 = vpow.pop %v1894
      %v1896 = vmul.f32 %v1845, 1.442695
      %v1897 = vpow.pop %v1896
      %v1898 = vmul.f32 %v1846, 1.442695
      %v1899 = vpow.pop %v1898
      %v1900 = vmul.f32 %v1847, 1.442695
      %v1901 = vpow.pop %v1900
      %v1902 = vmul.f32 %v1848, 1.442695
      %v1903 = vpow.pop %v1902
      %v1904 = vmul.f32 %v1849, 1.442695
      %v1905 = vpow.pop %v1904
      %v1906 = vmul.f32 %v1850, 1.442695
      %v1907 = vpow.pop %v1906
      %v1908 = vmul.f32 %v1851, 1.442695
      %v1909 = vpow.pop %v1908
      %v1910 = vmul.f32 %v1852, 1.442695
      %v1911 = vpow.pop %v1910
      %v1912 = vmul.f32 %v1853, 1.442695
      %v1913 = vpow.pop %v1912
      %v1914 = vmul.f32 %v1854, 1.442695
      %v1915 = vpow.pop %v1914
      %v1916 = vmul.f32 %v1855, 1.442695
      %v1917 = vpow.pop %v1916
      %v1918 = vmul.f32 %v1856, 1.442695
      %v1919 = vpow.pop %v1918
      %v1920 = vmul.f32 %v1857, 1.442695
      %v1921 = vpow.pop %v1920
      %1922 = vadd.xlane.f32.xlu0 %v1859
      %v1923 = vpop.xlane.xlu0 %1922
      %1924 = vadd.xlane.f32.xlu0 %v1861
      %v1925 = vpop.xlane.xlu0 %1924
      %1926 = vadd.xlane.f32.xlu0 %v1863
      %v1927 = vpop.xlane.xlu0 %1926
      %1928 = vadd.xlane.f32.xlu0 %v1865
      %v1929 = vpop.xlane.xlu0 %1928
      %1930 = vadd.xlane.f32.xlu0 %v1867
      %v1931 = vpop.xlane.xlu0 %1930
      %1932 = vadd.xlane.f32.xlu0 %v1869
      %v1933 = vpop.xlane.xlu0 %1932
      %1934 = vadd.xlane.f32.xlu0 %v1871
      %v1935 = vpop.xlane.xlu0 %1934
      %1936 = vadd.xlane.f32.xlu0 %v1873
      %v1937 = vpop.xlane.xlu0 %1936
      %1938 = vadd.xlane.f32.xlu0 %v1875
      %v1939 = vpop.xlane.xlu0 %1938
      %1940 = vadd.xlane.f32.xlu0 %v1877
      %v1941 = vpop.xlane.xlu0 %1940
      %1942 = vadd.xlane.f32.xlu0 %v1879
      %v1943 = vpop.xlane.xlu0 %1942
      %1944 = vadd.xlane.f32.xlu0 %v1881
      %v1945 = vpop.xlane.xlu0 %1944
      %1946 = vadd.xlane.f32.xlu0 %v1883
      %v1947 = vpop.xlane.xlu0 %1946
      %1948 = vadd.xlane.f32.xlu0 %v1885
      %v1949 = vpop.xlane.xlu0 %1948
      %1950 = vadd.xlane.f32.xlu0 %v1887
      %v1951 = vpop.xlane.xlu0 %1950
      %1952 = vadd.xlane.f32.xlu0 %v1889
      %v1953 = vpop.xlane.xlu0 %1952
      %1954 = vadd.xlane.f32.xlu0 %v1891
      %v1955 = vpop.xlane.xlu0 %1954
      %1956 = vadd.xlane.f32.xlu0 %v1893
      %v1957 = vpop.xlane.xlu0 %1956
      %1958 = vadd.xlane.f32.xlu0 %v1895
      %v1959 = vpop.xlane.xlu0 %1958
      %1960 = vadd.xlane.f32.xlu0 %v1897
      %v1961 = vpop.xlane.xlu0 %1960
      %1962 = vadd.xlane.f32.xlu0 %v1899
      %v1963 = vpop.xlane.xlu0 %1962
      %1964 = vadd.xlane.f32.xlu0 %v1901
      %v1965 = vpop.xlane.xlu0 %1964
      %1966 = vadd.xlane.f32.xlu0 %v1903
      %v1967 = vpop.xlane.xlu0 %1966
      %1968 = vadd.xlane.f32.xlu0 %v1905
      %v1969 = vpop.xlane.xlu0 %1968
      %1970 = vadd.xlane.f32.xlu0 %v1907
      %v1971 = vpop.xlane.xlu0 %1970
      %1972 = vadd.xlane.f32.xlu0 %v1909
      %v1973 = vpop.xlane.xlu0 %1972
      %1974 = vadd.xlane.f32.xlu0 %v1911
      %v1975 = vpop.xlane.xlu0 %1974
      %1976 = vadd.xlane.f32.xlu0 %v1913
      %v1977 = vpop.xlane.xlu0 %1976
      %1978 = vadd.xlane.f32.xlu0 %v1915
      %v1979 = vpop.xlane.xlu0 %1978
      %1980 = vadd.xlane.f32.xlu0 %v1917
      %v1981 = vpop.xlane.xlu0 %1980
      %1982 = vadd.xlane.f32.xlu0 %v1919
      %v1983 = vpop.xlane.xlu0 %1982
      %1984 = vadd.xlane.f32.xlu0 %v1921
      %v1985 = vpop.xlane.xlu0 %1984
      %v1986 = vrcp.pop %v1923
      %v1987 = vrcp.pop %v1925
      %v1988 = vrcp.pop %v1927
      %v1989 = vrcp.pop %v1929
      %v1990 = vrcp.pop %v1931
      %v1991 = vrcp.pop %v1933
      %v1992 = vrcp.pop %v1935
      %v1993 = vrcp.pop %v1937
      %v1994 = vrcp.pop %v1939
      %v1995 = vrcp.pop %v1941
      %v1996 = vrcp.pop %v1943
      %v1997 = vrcp.pop %v1945
      %v1998 = vrcp.pop %v1947
      %v1999 = vrcp.pop %v1949
      %v2000 = vrcp.pop %v1951
      %v2001 = vrcp.pop %v1953
      %v2002 = vrcp.pop %v1955
      %v2003 = vrcp.pop %v1957
      %v2004 = vrcp.pop %v1959
      %v2005 = vrcp.pop %v1961
      %v2006 = vrcp.pop %v1963
      %v2007 = vrcp.pop %v1965
      %v2008 = vrcp.pop %v1967
      %v2009 = vrcp.pop %v1969
      %v2010 = vrcp.pop %v1971
      %v2011 = vrcp.pop %v1973
      %v2012 = vrcp.pop %v1975
      %v2013 = vrcp.pop %v1977
      %v2014 = vrcp.pop %v1979
      %v2015 = vrcp.pop %v1981
      %v2016 = vrcp.pop %v1983
      %v2017 = vrcp.pop %v1985
      %v2018 = vmul.f32 %v1859, %v1986
      %v2019 = vmul.f32 %v1861, %v1987
      %v2020 = vmul.f32 %v1863, %v1988
      %v2021 = vmul.f32 %v1865, %v1989
      %v2022 = vmul.f32 %v1867, %v1990
      %v2023 = vmul.f32 %v1869, %v1991
      %v2024 = vmul.f32 %v1871, %v1992
      %v2025 = vmul.f32 %v1873, %v1993
      %v2026 = vmul.f32 %v1875, %v1994
      %v2027 = vmul.f32 %v1877, %v1995
      %v2028 = vmul.f32 %v1879, %v1996
      %v2029 = vmul.f32 %v1881, %v1997
      %v2030 = vmul.f32 %v1883, %v1998
      %v2031 = vmul.f32 %v1885, %v1999
      %v2032 = vmul.f32 %v1887, %v2000
      %v2033 = vmul.f32 %v1889, %v2001
      %v2034 = vmul.f32 %v1891, %v2002
      %v2035 = vmul.f32 %v1893, %v2003
      %v2036 = vmul.f32 %v1895, %v2004
      %v2037 = vmul.f32 %v1897, %v2005
      %v2038 = vmul.f32 %v1899, %v2006
      %v2039 = vmul.f32 %v1901, %v2007
      %v2040 = vmul.f32 %v1903, %v2008
      %v2041 = vmul.f32 %v1905, %v2009
      %v2042 = vmul.f32 %v1907, %v2010
      %v2043 = vmul.f32 %v1909, %v2011
      %v2044 = vmul.f32 %v1911, %v2012
      %v2045 = vmul.f32 %v1913, %v2013
      %v2046 = vmul.f32 %v1915, %v2014
      %v2047 = vmul.f32 %v1917, %v2015
      %v2048 = vmul.f32 %v1919, %v2016
      %v2049 = vmul.f32 %v1921, %v2017
      %2051 = vset.pattern.permute.xlu0 0
      %2052 = vperm.xlu0 %2051, %v2018
      %v2053 = vpop.permute.xlu0 %2052
      %2056 = vset.pattern.permute.xlu0 0
      %2057 = vperm.xlu0 %2056, %v2019
      %v2058 = vpop.permute.xlu0 %2057
      %2061 = vset.pattern.permute.xlu0 0
      %2062 = vperm.xlu0 %2061, %v2020
      %v2063 = vpop.permute.xlu0 %2062
      %2066 = vset.pattern.permute.xlu0 0
      %2067 = vperm.xlu0 %2066, %v2021
      %v2068 = vpop.permute.xlu0 %2067
      %2071 = vset.pattern.permute.xlu0 0
      %2072 = vperm.xlu0 %2071, %v2022
      %v2073 = vpop.permute.xlu0 %2072
      %2076 = vset.pattern.permute.xlu0 0
      %2077 = vperm.xlu0 %2076, %v2023
      %v2078 = vpop.permute.xlu0 %2077
      %2081 = vset.pattern.permute.xlu0 0
      %2082 = vperm.xlu0 %2081, %v2024
      %v2083 = vpop.permute.xlu0 %2082
      %2086 = vset.pattern.permute.xlu0 0
      %2087 = vperm.xlu0 %2086, %v2025
      %v2088 = vpop.permute.xlu0 %2087
      %2091 = vset.pattern.permute.xlu0 0
      %2092 = vperm.xlu0 %2091, %v2026
      %v2093 = vpop.permute.xlu0 %2092
      %2096 = vset.pattern.permute.xlu0 0
      %2097 = vperm.xlu0 %2096, %v2027
      %v2098 = vpop.permute.xlu0 %2097
      %2101 = vset.pattern.permute.xlu0 0
      %2102 = vperm.xlu0 %2101, %v2028
      %v2103 = vpop.permute.xlu0 %2102
      %2106 = vset.pattern.permute.xlu0 0
      %2107 = vperm.xlu0 %2106, %v2029
      %v2108 = vpop.permute.xlu0 %2107
      %2111 = vset.pattern.permute.xlu0 0
      %2112 = vperm.xlu0 %2111, %v2030
      %v2113 = vpop.permute.xlu0 %2112
      %2116 = vset.pattern.permute.xlu0 0
      %2117 = vperm.xlu0 %2116, %v2031
      %v2118 = vpop.permute.xlu0 %2117
      %2121 = vset.pattern.permute.xlu0 0
      %2122 = vperm.xlu0 %2121, %v2032
      %v2123 = vpop.permute.xlu0 %2122
      %2126 = vset.pattern.permute.xlu0 0
      %2127 = vperm.xlu0 %2126, %v2033
      %v2128 = vpop.permute.xlu0 %2127
      %2131 = vset.pattern.permute.xlu0 0
      %2132 = vperm.xlu0 %2131, %v2034
      %v2133 = vpop.permute.xlu0 %2132
      %2136 = vset.pattern.permute.xlu0 0
      %2137 = vperm.xlu0 %2136, %v2035
      %v2138 = vpop.permute.xlu0 %2137
      %2141 = vset.pattern.permute.xlu0 0
      %2142 = vperm.xlu0 %2141, %v2036
      %v2143 = vpop.permute.xlu0 %2142
      %2146 = vset.pattern.permute.xlu0 0
      %2147 = vperm.xlu0 %2146, %v2037
      %v2148 = vpop.permute.xlu0 %2147
      %2151 = vset.pattern.permute.xlu0 0
      %2152 = vperm.xlu0 %2151, %v2038
      %v2153 = vpop.permute.xlu0 %2152
      %2156 = vset.pattern.permute.xlu0 0
      %2157 = vperm.xlu0 %2156, %v2039
      %v2158 = vpop.permute.xlu0 %2157
      %2161 = vset.pattern.permute.xlu0 0
      %2162 = vperm.xlu0 %2161, %v2040
      %v2163 = vpop.permute.xlu0 %2162
      %2166 = vset.pattern.permute.xlu0 0
      %2167 = vperm.xlu0 %2166, %v2041
      %v2168 = vpop.permute.xlu0 %2167
      %2171 = vset.pattern.permute.xlu0 0
      %2172 = vperm.xlu0 %2171, %v2042
      %v2173 = vpop.permute.xlu0 %2172
      %2176 = vset.pattern.permute.xlu0 0
      %2177 = vperm.xlu0 %2176, %v2043
      %v2178 = vpop.permute.xlu0 %2177
      %2181 = vset.pattern.permute.xlu0 0
      %2182 = vperm.xlu0 %2181, %v2044
      %v2183 = vpop.permute.xlu0 %2182
      %2186 = vset.pattern.permute.xlu0 0
      %2187 = vperm.xlu0 %2186, %v2045
      %v2188 = vpop.permute.xlu0 %2187
      %2191 = vset.pattern.permute.xlu0 0
      %2192 = vperm.xlu0 %2191, %v2046
      %v2193 = vpop.permute.xlu0 %2192
      %2196 = vset.pattern.permute.xlu0 0
      %2197 = vperm.xlu0 %2196, %v2047
      %v2198 = vpop.permute.xlu0 %2197
      %2201 = vset.pattern.permute.xlu0 0
      %2202 = vperm.xlu0 %2201, %v2048
      %v2203 = vpop.permute.xlu0 %2202
      %2206 = vset.pattern.permute.xlu0 0
      %2207 = vperm.xlu0 %2206, %v2049
      %v2208 = vpop.permute.xlu0 %2207
      %v2210 = vmul.f32 %v560, %v2053
      %v2211 = vmul.f32 %v562, %v2058
      %v2212 = vmul.f32 %v565, %v2063
      %v2213 = vmul.f32 %v567, %v2068
      %v2214 = vmul.f32 %v570, %v2073
      %v2215 = vmul.f32 %v572, %v2078
      %v2216 = vmul.f32 %v575, %v2083
      %v2217 = vmul.f32 %v577, %v2088
      %v2218 = vmul.f32 %v580, %v2093
      %v2219 = vmul.f32 %v582, %v2098
      %v2220 = vmul.f32 %v585, %v2103
      %v2221 = vmul.f32 %v587, %v2108
      %v2222 = vmul.f32 %v590, %v2113
      %v2223 = vmul.f32 %v592, %v2118
      %v2224 = vmul.f32 %v595, %v2123
      %v2225 = vmul.f32 %v597, %v2128
      %v2226 = vmul.f32 %v600, %v2133
      %v2227 = vmul.f32 %v602, %v2138
      %v2228 = vmul.f32 %v605, %v2143
      %v2229 = vmul.f32 %v607, %v2148
      %v2230 = vmul.f32 %v610, %v2153
      %v2231 = vmul.f32 %v612, %v2158
      %v2232 = vmul.f32 %v615, %v2163
      %v2233 = vmul.f32 %v617, %v2168
      %v2234 = vmul.f32 %v620, %v2173
      %v2235 = vmul.f32 %v622, %v2178
      %v2236 = vmul.f32 %v625, %v2183
      %v2237 = vmul.f32 %v627, %v2188
      %v2238 = vmul.f32 %v630, %v2193
      %v2239 = vmul.f32 %v632, %v2198
      %v2240 = vmul.f32 %v635, %v2203
      %v2241 = vmul.f32 %v637, %v2208
      %2242 = vset.pattern.permute.xlu0 1
      %2243 = vperm.xlu0 %2242, %v2018
      %v2244 = vpop.permute.xlu0 %2243
      %2246 = vset.pattern.permute.xlu0 1
      %2247 = vperm.xlu0 %2246, %v2019
      %v2248 = vpop.permute.xlu0 %2247
      %2250 = vset.pattern.permute.xlu0 1
      %2251 = vperm.xlu0 %2250, %v2020
      %v2252 = vpop.permute.xlu0 %2251
      %2254 = vset.pattern.permute.xlu0 1
      %2255 = vperm.xlu0 %2254, %v2021
      %v2256 = vpop.permute.xlu0 %2255
      %2258 = vset.pattern.permute.xlu0 1
      %2259 = vperm.xlu0 %2258, %v2022
      %v2260 = vpop.permute.xlu0 %2259
      %2262 = vset.pattern.permute.xlu0 1
      %2263 = vperm.xlu0 %2262, %v2023
      %v2264 = vpop.permute.xlu0 %2263
      %2266 = vset.pattern.permute.xlu0 1
      %2267 = vperm.xlu0 %2266, %v2024
      %v2268 = vpop.permute.xlu0 %2267
      %2270 = vset.pattern.permute.xlu0 1
      %2271 = vperm.xlu0 %2270, %v2025
      %v2272 = vpop.permute.xlu0 %2271
      %2274 = vset.pattern.permute.xlu0 1
      %2275 = vperm.xlu0 %2274, %v2026
      %v2276 = vpop.permute.xlu0 %2275
      %2278 = vset.pattern.permute.xlu0 1
      %2279 = vperm.xlu0 %2278, %v2027
      %v2280 = vpop.permute.xlu0 %2279
      %2282 = vset.pattern.permute.xlu0 1
      %2283 = vperm.xlu0 %2282, %v2028
      %v2284 = vpop.permute.xlu0 %2283
      %2286 = vset.pattern.permute.xlu0 1
      %2287 = vperm.xlu0 %2286, %v2029
      %v2288 = vpop.permute.xlu0 %2287
      %2290 = vset.pattern.permute.xlu0 1
      %2291 = vperm.xlu0 %2290, %v2030
      %v2292 = vpop.permute.xlu0 %2291
      %2294 = vset.pattern.permute.xlu0 1
      %2295 = vperm.xlu0 %2294, %v2031
      %v2296 = vpop.permute.xlu0 %2295
      %2298 = vset.pattern.permute.xlu0 1
      %2299 = vperm.xlu0 %2298, %v2032
      %v2300 = vpop.permute.xlu0 %2299
      %2302 = vset.pattern.permute.xlu0 1
      %2303 = vperm.xlu0 %2302, %v2033
      %v2304 = vpop.permute.xlu0 %2303
      %2306 = vset.pattern.permute.xlu0 1
      %2307 = vperm.xlu0 %2306, %v2034
      %v2308 = vpop.permute.xlu0 %2307
      %2310 = vset.pattern.permute.xlu0 1
      %2311 = vperm.xlu0 %2310, %v2035
      %v2312 = vpop.permute.xlu0 %2311
      %2314 = vset.pattern.permute.xlu0 1
      %2315 = vperm.xlu0 %2314, %v2036
      %v2316 = vpop.permute.xlu0 %2315
      %2318 = vset.pattern.permute.xlu0 1
      %2319 = vperm.xlu0 %2318, %v2037
      %v2320 = vpop.permute.xlu0 %2319
      %2322 = vset.pattern.permute.xlu0 1
      %2323 = vperm.xlu0 %2322, %v2038
      %v2324 = vpop.permute.xlu0 %2323
      %2326 = vset.pattern.permute.xlu0 1
      %2327 = vperm.xlu0 %2326, %v2039
      %v2328 = vpop.permute.xlu0 %2327
      %2330 = vset.pattern.permute.xlu0 1
      %2331 = vperm.xlu0 %2330, %v2040
      %v2332 = vpop.permute.xlu0 %2331
      %2334 = vset.pattern.permute.xlu0 1
      %2335 = vperm.xlu0 %2334, %v2041
      %v2336 = vpop.permute.xlu0 %2335
      %2338 = vset.pattern.permute.xlu0 1
      %2339 = vperm.xlu0 %2338, %v2042
      %v2340 = vpop.permute.xlu0 %2339
      %2342 = vset.pattern.permute.xlu0 1
      %2343 = vperm.xlu0 %2342, %v2043
      %v2344 = vpop.permute.xlu0 %2343
      %2346 = vset.pattern.permute.xlu0 1
      %2347 = vperm.xlu0 %2346, %v2044
      %v2348 = vpop.permute.xlu0 %2347
      %2350 = vset.pattern.permute.xlu0 1
      %2351 = vperm.xlu0 %2350, %v2045
      %v2352 = vpop.permute.xlu0 %2351
      %2354 = vset.pattern.permute.xlu0 1
      %2355 = vperm.xlu0 %2354, %v2046
      %v2356 = vpop.permute.xlu0 %2355
      %2358 = vset.pattern.permute.xlu0 1
      %2359 = vperm.xlu0 %2358, %v2047
      %v2360 = vpop.permute.xlu0 %2359
      %2362 = vset.pattern.permute.xlu0 1
      %2363 = vperm.xlu0 %2362, %v2048
      %v2364 = vpop.permute.xlu0 %2363
      %2366 = vset.pattern.permute.xlu0 1
      %2367 = vperm.xlu0 %2366, %v2049
      %v2368 = vpop.permute.xlu0 %2367
      %v2370 = vmul.f32 %v1020, %v2244
      %v2371 = vmul.f32 %v1022, %v2248
      %v2372 = vmul.f32 %v1025, %v2252
      %v2373 = vmul.f32 %v1027, %v2256
      %v2374 = vmul.f32 %v1030, %v2260
      %v2375 = vmul.f32 %v1032, %v2264
      %v2376 = vmul.f32 %v1035, %v2268
      %v2377 = vmul.f32 %v1037, %v2272
      %v2378 = vmul.f32 %v1040, %v2276
      %v2379 = vmul.f32 %v1042, %v2280
      %v2380 = vmul.f32 %v1045, %v2284
      %v2381 = vmul.f32 %v1047, %v2288
      %v2382 = vmul.f32 %v1050, %v2292
      %v2383 = vmul.f32 %v1052, %v2296
      %v2384 = vmul.f32 %v1055, %v2300
      %v2385 = vmul.f32 %v1057, %v2304
      %v2386 = vmul.f32 %v1060, %v2308
      %v2387 = vmul.f32 %v1062, %v2312
      %v2388 = vmul.f32 %v1065, %v2316
      %v2389 = vmul.f32 %v1067, %v2320
      %v2390 = vmul.f32 %v1070, %v2324
      %v2391 = vmul.f32 %v1072, %v2328
      %v2392 = vmul.f32 %v1075, %v2332
      %v2393 = vmul.f32 %v1077, %v2336
      %v2394 = vmul.f32 %v1080, %v2340
      %v2395 = vmul.f32 %v1082, %v2344
      %v2396 = vmul.f32 %v1085, %v2348
      %v2397 = vmul.f32 %v1087, %v2352
      %v2398 = vmul.f32 %v1090, %v2356
      %v2399 = vmul.f32 %v1092, %v2360
      %v2400 = vmul.f32 %v1095, %v2364
      %v2401 = vmul.f32 %v1097, %v2368
      %v2402 = vadd.f32 %v2210, %v2370
      %v2403 = vadd.f32 %v2211, %v2371
      %v2404 = vadd.f32 %v2212, %v2372
      %v2405 = vadd.f32 %v2213, %v2373
      %v2406 = vadd.f32 %v2214, %v2374
      %v2407 = vadd.f32 %v2215, %v2375
      %v2408 = vadd.f32 %v2216, %v2376
      %v2409 = vadd.f32 %v2217, %v2377
      %v2410 = vadd.f32 %v2218, %v2378
      %v2411 = vadd.f32 %v2219, %v2379
      %v2412 = vadd.f32 %v2220, %v2380
      %v2413 = vadd.f32 %v2221, %v2381
      %v2414 = vadd.f32 %v2222, %v2382
      %v2415 = vadd.f32 %v2223, %v2383
      %v2416 = vadd.f32 %v2224, %v2384
      %v2417 = vadd.f32 %v2225, %v2385
      %v2418 = vadd.f32 %v2226, %v2386
      %v2419 = vadd.f32 %v2227, %v2387
      %v2420 = vadd.f32 %v2228, %v2388
      %v2421 = vadd.f32 %v2229, %v2389
      %v2422 = vadd.f32 %v2230, %v2390
      %v2423 = vadd.f32 %v2231, %v2391
      %v2424 = vadd.f32 %v2232, %v2392
      %v2425 = vadd.f32 %v2233, %v2393
      %v2426 = vadd.f32 %v2234, %v2394
      %v2427 = vadd.f32 %v2235, %v2395
      %v2428 = vadd.f32 %v2236, %v2396
      %v2429 = vadd.f32 %v2237, %v2397
      %v2430 = vadd.f32 %v2238, %v2398
      %v2431 = vadd.f32 %v2239, %v2399
      %v2432 = vadd.f32 %v2240, %v2400
      %v2433 = vadd.f32 %v2241, %v2401
      %2434 = vset.pattern.permute.xlu0 2
      %2435 = vperm.xlu0 %2434, %v2018
      %v2436 = vpop.permute.xlu0 %2435
      %2438 = vset.pattern.permute.xlu0 2
      %2439 = vperm.xlu0 %2438, %v2019
      %v2440 = vpop.permute.xlu0 %2439
      %2442 = vset.pattern.permute.xlu0 2
      %2443 = vperm.xlu0 %2442, %v2020
      %v2444 = vpop.permute.xlu0 %2443
      %2446 = vset.pattern.permute.xlu0 2
      %2447 = vperm.xlu0 %2446, %v2021
      %v2448 = vpop.permute.xlu0 %2447
      %2450 = vset.pattern.permute.xlu0 2
      %2451 = vperm.xlu0 %2450, %v2022
      %v2452 = vpop.permute.xlu0 %2451
      %2454 = vset.pattern.permute.xlu0 2
      %2455 = vperm.xlu0 %2454, %v2023
      %v2456 = vpop.permute.xlu0 %2455
      %2458 = vset.pattern.permute.xlu0 2
      %2459 = vperm.xlu0 %2458, %v2024
      %v2460 = vpop.permute.xlu0 %2459
      %2462 = vset.pattern.permute.xlu0 2
      %2463 = vperm.xlu0 %2462, %v2025
      %v2464 = vpop.permute.xlu0 %2463
      %2466 = vset.pattern.permute.xlu0 2
      %2467 = vperm.xlu0 %2466, %v2026
      %v2468 = vpop.permute.xlu0 %2467
      %2470 = vset.pattern.permute.xlu0 2
      %2471 = vperm.xlu0 %2470, %v2027
      %v2472 = vpop.permute.xlu0 %2471
      %2474 = vset.pattern.permute.xlu0 2
      %2475 = vperm.xlu0 %2474, %v2028
      %v2476 = vpop.permute.xlu0 %2475
      %2478 = vset.pattern.permute.xlu0 2
      %2479 = vperm.xlu0 %2478, %v2029
      %v2480 = vpop.permute.xlu0 %2479
      %2482 = vset.pattern.permute.xlu0 2
      %2483 = vperm.xlu0 %2482, %v2030
      %v2484 = vpop.permute.xlu0 %2483
      %2486 = vset.pattern.permute.xlu0 2
      %2487 = vperm.xlu0 %2486, %v2031
      %v2488 = vpop.permute.xlu0 %2487
      %2490 = vset.pattern.permute.xlu0 2
      %2491 = vperm.xlu0 %2490, %v2032
      %v2492 = vpop.permute.xlu0 %2491
      %2494 = vset.pattern.permute.xlu0 2
      %2495 = vperm.xlu0 %2494, %v2033
      %v2496 = vpop.permute.xlu0 %2495
      %2498 = vset.pattern.permute.xlu0 2
      %2499 = vperm.xlu0 %2498, %v2034
      %v2500 = vpop.permute.xlu0 %2499
      %2502 = vset.pattern.permute.xlu0 2
      %2503 = vperm.xlu0 %2502, %v2035
      %v2504 = vpop.permute.xlu0 %2503
      %2506 = vset.pattern.permute.xlu0 2
      %2507 = vperm.xlu0 %2506, %v2036
      %v2508 = vpop.permute.xlu0 %2507
      %2510 = vset.pattern.permute.xlu0 2
      %2511 = vperm.xlu0 %2510, %v2037
      %v2512 = vpop.permute.xlu0 %2511
      %2514 = vset.pattern.permute.xlu0 2
      %2515 = vperm.xlu0 %2514, %v2038
      %v2516 = vpop.permute.xlu0 %2515
      %2518 = vset.pattern.permute.xlu0 2
      %2519 = vperm.xlu0 %2518, %v2039
      %v2520 = vpop.permute.xlu0 %2519
      %2522 = vset.pattern.permute.xlu0 2
      %2523 = vperm.xlu0 %2522, %v2040
      %v2524 = vpop.permute.xlu0 %2523
      %2526 = vset.pattern.permute.xlu0 2
      %2527 = vperm.xlu0 %2526, %v2041
      %v2528 = vpop.permute.xlu0 %2527
      %2530 = vset.pattern.permute.xlu0 2
      %2531 = vperm.xlu0 %2530, %v2042
      %v2532 = vpop.permute.xlu0 %2531
      %2534 = vset.pattern.permute.xlu0 2
      %2535 = vperm.xlu0 %2534, %v2043
      %v2536 = vpop.permute.xlu0 %2535
      %2538 = vset.pattern.permute.xlu0 2
      %2539 = vperm.xlu0 %2538, %v2044
      %v2540 = vpop.permute.xlu0 %2539
      %2542 = vset.pattern.permute.xlu0 2
      %2543 = vperm.xlu0 %2542, %v2045
      %v2544 = vpop.permute.xlu0 %2543
      %2546 = vset.pattern.permute.xlu0 2
      %2547 = vperm.xlu0 %2546, %v2046
      %v2548 = vpop.permute.xlu0 %2547
      %2550 = vset.pattern.permute.xlu0 2
      %2551 = vperm.xlu0 %2550, %v2047
      %v2552 = vpop.permute.xlu0 %2551
      %2554 = vset.pattern.permute.xlu0 2
      %2555 = vperm.xlu0 %2554, %v2048
      %v2556 = vpop.permute.xlu0 %2555
      %2558 = vset.pattern.permute.xlu0 2
      %2559 = vperm.xlu0 %2558, %v2049
      %v2560 = vpop.permute.xlu0 %2559
      %v2562 = vmul.f32 %v1481, %v2436
      %v2563 = vmul.f32 %v1483, %v2440
      %v2564 = vmul.f32 %v1486, %v2444
      %v2565 = vmul.f32 %v1488, %v2448
      %v2566 = vmul.f32 %v1491, %v2452
      %v2567 = vmul.f32 %v1493, %v2456
      %v2568 = vmul.f32 %v1496, %v2460
      %v2569 = vmul.f32 %v1498, %v2464
      %v2570 = vmul.f32 %v1501, %v2468
      %v2571 = vmul.f32 %v1503, %v2472
      %v2572 = vmul.f32 %v1506, %v2476
      %v2573 = vmul.f32 %v1508, %v2480
      %v2574 = vmul.f32 %v1511, %v2484
      %v2575 = vmul.f32 %v1513, %v2488
      %v2576 = vmul.f32 %v1516, %v2492
      %v2577 = vmul.f32 %v1518, %v2496
      %v2578 = vmul.f32 %v1521, %v2500
      %v2579 = vmul.f32 %v1523, %v2504
      %v2580 = vmul.f32 %v1526, %v2508
      %v2581 = vmul.f32 %v1528, %v2512
      %v2582 = vmul.f32 %v1531, %v2516
      %v2583 = vmul.f32 %v1533, %v2520
      %v2584 = vmul.f32 %v1536, %v2524
      %v2585 = vmul.f32 %v1538, %v2528
      %v2586 = vmul.f32 %v1541, %v2532
      %v2587 = vmul.f32 %v1543, %v2536
      %v2588 = vmul.f32 %v1546, %v2540
      %v2589 = vmul.f32 %v1548, %v2544
      %v2590 = vmul.f32 %v1551, %v2548
      %v2591 = vmul.f32 %v1553, %v2552
      %v2592 = vmul.f32 %v1556, %v2556
      %v2593 = vmul.f32 %v1558, %v2560
      %v2594 = vadd.f32 %v2402, %v2562
      %v2595 = vadd.f32 %v2403, %v2563
      %v2596 = vadd.f32 %v2404, %v2564
      %v2597 = vadd.f32 %v2405, %v2565
      %v2598 = vadd.f32 %v2406, %v2566
      %v2599 = vadd.f32 %v2407, %v2567
      %v2600 = vadd.f32 %v2408, %v2568
      %v2601 = vadd.f32 %v2409, %v2569
      %v2602 = vadd.f32 %v2410, %v2570
      %v2603 = vadd.f32 %v2411, %v2571
      %v2604 = vadd.f32 %v2412, %v2572
      %v2605 = vadd.f32 %v2413, %v2573
      %v2606 = vadd.f32 %v2414, %v2574
      %v2607 = vadd.f32 %v2415, %v2575
      %v2608 = vadd.f32 %v2416, %v2576
      %v2609 = vadd.f32 %v2417, %v2577
      %v2610 = vadd.f32 %v2418, %v2578
      %v2611 = vadd.f32 %v2419, %v2579
      %v2612 = vadd.f32 %v2420, %v2580
      %v2613 = vadd.f32 %v2421, %v2581
      %v2614 = vadd.f32 %v2422, %v2582
      %v2615 = vadd.f32 %v2423, %v2583
      %v2616 = vadd.f32 %v2424, %v2584
      %v2617 = vadd.f32 %v2425, %v2585
      %v2618 = vadd.f32 %v2426, %v2586
      %v2619 = vadd.f32 %v2427, %v2587
      %v2620 = vadd.f32 %v2428, %v2588
      %v2621 = vadd.f32 %v2429, %v2589
      %v2622 = vadd.f32 %v2430, %v2590
      %v2623 = vadd.f32 %v2431, %v2591
      %v2624 = vadd.f32 %v2432, %v2592
      %v2625 = vadd.f32 %v2433, %v2593
      %v2626 = vpack.c.bf16 %v2594, %v2594
      %v2627 = vpack.c.bf16 %v2595, %v2595
      %v2628 = vpack.c.bf16 %v2596, %v2596
      %v2629 = vpack.c.bf16 %v2597, %v2597
      %v2630 = vpack.c.bf16 %v2598, %v2598
      %v2631 = vpack.c.bf16 %v2599, %v2599
      %v2632 = vpack.c.bf16 %v2600, %v2600
      %v2633 = vpack.c.bf16 %v2601, %v2601
      %v2634 = vpack.c.bf16 %v2602, %v2602
      %v2635 = vpack.c.bf16 %v2603, %v2603
      %v2636 = vpack.c.bf16 %v2604, %v2604
      %v2637 = vpack.c.bf16 %v2605, %v2605
      %v2638 = vpack.c.bf16 %v2606, %v2606
      %v2639 = vpack.c.bf16 %v2607, %v2607
      %v2640 = vpack.c.bf16 %v2608, %v2608
      %v2641 = vpack.c.bf16 %v2609, %v2609
      %v2642 = vpack.c.bf16 %v2610, %v2610
      %v2643 = vpack.c.bf16 %v2611, %v2611
      %v2644 = vpack.c.bf16 %v2612, %v2612
      %v2645 = vpack.c.bf16 %v2613, %v2613
      %v2646 = vpack.c.bf16 %v2614, %v2614
      %v2647 = vpack.c.bf16 %v2615, %v2615
      %v2648 = vpack.c.bf16 %v2616, %v2616
      %v2649 = vpack.c.bf16 %v2617, %v2617
      %v2650 = vpack.c.bf16 %v2618, %v2618
      %v2651 = vpack.c.bf16 %v2619, %v2619
      %v2652 = vpack.c.bf16 %v2620, %v2620
      %v2653 = vpack.c.bf16 %v2621, %v2621
      %v2654 = vpack.c.bf16 %v2622, %v2622
      %v2655 = vpack.c.bf16 %v2623, %v2623
      %v2656 = vpack.c.bf16 %v2624, %v2624
      %v2657 = vpack.c.bf16 %v2625, %v2625
      %vm2658 = vcmask 257024
      %2659 = vst.msk [vmem:[%s378] sm:$0xf] %vm2658, %v2626
      %2660 = vst.msk [vmem:[%s378 + $0x4] sm:$0xf] %vm2658, %v2627
      %2661 = vst.msk [vmem:[%s378 + $0x8] sm:$0xf] %vm2658, %v2628
      %2662 = vst.msk [vmem:[%s378 + $0xc] sm:$0xf] %vm2658, %v2629
      %2663 = vst.msk [vmem:[%s378 + $0x10] sm:$0xf] %vm2658, %v2630
      %2664 = vst.msk [vmem:[%s378 + $0x14] sm:$0xf] %vm2658, %v2631
      %2665 = vst.msk [vmem:[%s378 + $0x18] sm:$0xf] %vm2658, %v2632
      %2666 = vst.msk [vmem:[%s378 + $0x1c] sm:$0xf] %vm2658, %v2633
      %2667 = vst.msk [vmem:[%s378 + $0x20] sm:$0xf] %vm2658, %v2634
      %2668 = vst.msk [vmem:[%s378 + $0x24] sm:$0xf] %vm2658, %v2635
      %2669 = vst.msk [vmem:[%s378 + $0x28] sm:$0xf] %vm2658, %v2636
      %2670 = vst.msk [vmem:[%s378 + $0x2c] sm:$0xf] %vm2658, %v2637
      %2671 = vst.msk [vmem:[%s378 + $0x30] sm:$0xf] %vm2658, %v2638
      %2672 = vst.msk [vmem:[%s378 + $0x34] sm:$0xf] %vm2658, %v2639
      %2673 = vst.msk [vmem:[%s378 + $0x38] sm:$0xf] %vm2658, %v2640
      %2674 = vst.msk [vmem:[%s378 + $0x3c] sm:$0xf] %vm2658, %v2641
      %2675 = vst.msk [vmem:[%s378 + $0x40] sm:$0xf] %vm2658, %v2642
      %2676 = vst.msk [vmem:[%s378 + $0x44] sm:$0xf] %vm2658, %v2643
      %2677 = vst.msk [vmem:[%s378 + $0x48] sm:$0xf] %vm2658, %v2644
      %2678 = vst.msk [vmem:[%s378 + $0x4c] sm:$0xf] %vm2658, %v2645
      %2679 = vst.msk [vmem:[%s378 + $0x50] sm:$0xf] %vm2658, %v2646
      %2680 = vst.msk [vmem:[%s378 + $0x54] sm:$0xf] %vm2658, %v2647
      %2681 = vst.msk [vmem:[%s378 + $0x58] sm:$0xf] %vm2658, %v2648
      %2682 = vst.msk [vmem:[%s378 + $0x5c] sm:$0xf] %vm2658, %v2649
      %2683 = vst.msk [vmem:[%s378 + $0x60] sm:$0xf] %vm2658, %v2650
      %2684 = vst.msk [vmem:[%s378 + $0x64] sm:$0xf] %vm2658, %v2651
      %2685 = vst.msk [vmem:[%s378 + $0x68] sm:$0xf] %vm2658, %v2652
      %2686 = vst.msk [vmem:[%s378 + $0x6c] sm:$0xf] %vm2658, %v2653
      %2687 = vst.msk [vmem:[%s378 + $0x70] sm:$0xf] %vm2658, %v2654
      %2688 = vst.msk [vmem:[%s378 + $0x74] sm:$0xf] %vm2658, %v2655
      %2689 = vst.msk [vmem:[%s378 + $0x78] sm:$0xf] %vm2658, %v2656
      %2690 = vst.msk [vmem:[%s378 + $0x7c] sm:$0xf] %vm2658, %v2657
      %s2691 = smul.u32 32, %s20
      %p2692 = scmp.lt.s32.totalorder %s2691, 63
      %s2693 = scalar_select %p2692, %s2691, 63
      %s2694 = smul.addr %s2693, 4
      %s2695 = scalar_lea.vmem %s9, %s2694
      // Predicated region
      $region57: #{tpu_custom_call.1} parent=55 // pred_check
        %p2696 = pneg %p242
      $region58: #{tpu_custom_call.1} parent=55 // pred_check_branch
        %2698 = sbr.rel (%p2696) target = $region60
      $region59: #{tpu_custom_call.1} parent=55 // pred_region
        %s2699 = smul.u32 32, %s20
      $region60: #{tpu_custom_call.1} parent=55 // pred_fallthru
        _
    $region56: #{tpu_custom_call.1} parent=5 // pred_fallthru
      _
    %p2700 = scmp.le.s32.totalorder 2, %s15
    // Predicated region
    $region61: #{tpu_custom_call.1} parent=5 // pred_check
      %p2701 = pneg %p2700
    $region62: #{tpu_custom_call.1} parent=5 // pred_check_branch
      %2703 = sbr.rel (%p2701) target = $region64
    $region63: #{tpu_custom_call.1} parent=5 // pred_region
      %s2704 = ssub.s32 %s15, 2
      // Predicated region
      $region65: #{tpu_custom_call.1} parent=63 // pred_check
        %p2705 = pneg %p248
      $region66: #{tpu_custom_call.1} parent=63 // pred_check_branch
        %2707 = sbr.rel (%p2705) target = $region68
      $region67: #{tpu_custom_call.1} parent=63 // pred_region
        %s2708 = smul.u32 32, %s21
        %p2709 = scmp.lt.s32.totalorder %s2708, 63
        %s2710 = scalar_select %p2709, %s2708, 63
        %s2711 = smul.addr %s2710, 4
        %s2712 = scalar_lea.vmem %s9, %s2711
      $region68: #{tpu_custom_call.1} parent=63 // pred_fallthru
        _
    $region64: #{tpu_custom_call.1} parent=5 // pred_fallthru
      _
  $region6: #{tpu_custom_call.1} parent=0 // loop_footer
    %s19 = sadd.s32 1, %s15
  $region7: #{tpu_custom_call.1} parent=0 // loop_footer_branch
    %14 = sbr.rel target = $region3
  $region8: #{tpu_custom_call.1} parent=0 // loop_exit
    _

</llo_original>
